<compile_context>
chip_gen: v5e
topology: v5e:2x2
jax: 0.10.0
libtpu: 0.0.40
codegen_flags: <defaults>
</compile_context>

<pallas_src>
import functools

import jax
import jax.numpy as jnp
from jax.experimental import pallas as pl
from jax.experimental.pallas import tpu as pltpu


def _round_up(v, m):
    return ((v + m - 1) // m) * m


def _tpu_vmem_capacity_bytes():
    """Physical VMEM per core, with a conservative fallback."""
    default = 64 * 1024 * 1024
    try:
        cap = getattr(pltpu.get_tpu_info(), "vmem_capacity_bytes", None)
        return int(cap) if cap else default
    except Exception:
        return default


def _choose_tiles(n128):
    """Pick (tm, tk, vmem_limit_bytes) from the VMEM budget, clamped to n128."""
    cap = _tpu_vmem_capacity_bytes()
    if cap >= 100 * 1024 * 1024:       # v5e / v6e: 128 MiB physical VMEM
        tm, tk = 256, 512
    else:                              # v7x: 64 MiB per TensorCore
        tm, tk = 256, 256
    # TODO(synk): single-buffer the resident weight BlockSpecs
    # (pipeline_mode=pl.Buffered(1)) and deepen the adj buffer on 64 MiB-VMEM
    # parts once hidden dims get large; not needed at these sizes.

    def clamp(t):
        while t > n128 and t > 128:
            t //= 2
        return t

    vmem_limit = min(int(cap * 3 // 4), 100 * 1024 * 1024)
    return clamp(tm), clamp(tk), vmem_limit


def _role_combine(eff, stacked, n_eff, d_pad):
    """Combine fused per-role linear outputs with effective role coefficients.

    stacked: [T, n_eff*d_pad] (role block r occupies lanes [r*d_pad,(r+1)*d_pad))
    eff:     [T, n_eff] effective coefficients (already encode the reference's
             double-count of role 0 and the never-used last linear).
    """
    out = eff[:, 0:1] * stacked[:, 0:d_pad]
    for r in range(1, n_eff):
        out = out + eff[:, r:r + 1] * stacked[:, r * d_pad:(r + 1) * d_pad]
    return out


# -----------------------------------------------------------------------------
# Kernel 1: message() for ALL source nodes (computed once per layer)
# -----------------------------------------------------------------------------
def _message_kernel(eff_ref, feat_ref, wm_ref, bm_ref, msg_ref, *, n_eff, d_pad):
    s = jnp.dot(feat_ref[...], wm_ref[...],
                preferred_element_type=jnp.float32) + bm_ref[...]
    msg = jnp.maximum(_role_combine(eff_ref[...], s, n_eff, d_pad), 0.0)
    msg_ref[...] = msg.astype(msg_ref.dtype)


def message_pass(eff, feat, conv_p, *, n_eff, d_pad, tm, vmem_limit):
    n_pad, d_in_pad = feat.shape
    wm, bm = conv_p["wm"], conv_p["bm"]
    r_stack = wm.shape[1]
    eff_cols = eff.shape[1]

    cost = pl.CostEstimate(
        flops=int(2 * n_pad * d_in_pad * r_stack + 3 * n_pad * r_stack),
        transcendentals=0,
        bytes_accessed=int(eff.size * 4 + feat.size * 2 + wm.size * 2
                           + bm.size * 4 + n_pad * d_pad * 2))

    return pl.pallas_call(
        functools.partial(_message_kernel, n_eff=n_eff, d_pad=d_pad),
        out_shape=jax.ShapeDtypeStruct((n_pad, d_pad), jnp.bfloat16),
        grid_spec=pltpu.PrefetchScalarGridSpec(
            num_scalar_prefetch=0,
            grid=(n_pad // tm,),
            in_specs=[
                pl.BlockSpec((tm, eff_cols), lambda i: (i, 0)),
                pl.BlockSpec((tm, d_in_pad), lambda i: (i, 0)),
                pl.BlockSpec((d_in_pad, r_stack), lambda i: (0, 0)),
                pl.BlockSpec((1, r_stack), lambda i: (0, 0)),
            ],
            out_specs=pl.BlockSpec((tm, d_pad), lambda i: (i, 0))),
        compiler_params=pltpu.CompilerParams(
            dimension_semantics=("parallel",),
            vmem_limit_bytes=vmem_limit),
        cost_estimate=cost,
    )(eff, feat, wm, bm)


# -----------------------------------------------------------------------------
# Kernel 2: mean aggregation (K-blocked adj @ msg) + update() + L2 normalize
# -----------------------------------------------------------------------------
def _aggregate_update_kernel(eff_ref, feat_ref, invdeg_ref, adj_ref, msg_ref,
                             waf_ref, waa_ref, ba_ref, out_ref, acc_ref,
                             *, n_eff, d_pad):
    k = pl.program_id(1)

    @pl.when(k == 0)
    def _():
        acc_ref[...] = jnp.zeros_like(acc_ref)

    # scatter-sum of precomputed messages: edge-count adj tile @ msg tile.
    acc_ref[...] += jnp.dot(adj_ref[...], msg_ref[...],
                            preferred_element_type=jnp.float32)

    @pl.when(k == pl.num_programs(1) - 1)
    def _():
        # aggr='mean': exact f32 division by in-degree (0 for isolated nodes).
        aggr = acc_ref[...] * invdeg_ref[...]
        # update(): cat(feat, aggr) @ W_agg == feat @ W_feat + aggr @ W_aggr
        s = (jnp.dot(feat_ref[...], waf_ref[...],
                     preferred_element_type=jnp.float32)
             + jnp.dot(aggr.astype(waa_ref.dtype), waa_ref[...],
                       preferred_element_type=jnp.float32)
             + ba_ref[...])
        upd = jnp.maximum(_role_combine(eff_ref[...], s, n_eff, d_pad), 0.0)
        # F.normalize(p=2, dim=1), eps=1e-12 (rsqrt uses the otherwise-idle EUP).
        ssq = jnp.sum(upd * upd, axis=1, keepdims=True)
        out_ref[...] = (upd * jax.lax.rsqrt(jnp.maximum(ssq, 1e-24))
                        ).astype(out_ref.dtype)


def aggregate_update(eff, feat, invdeg, adj, msg, conv_p, *, n_eff, d_pad,
                     tm, tk, vmem_limit):
    n_pad, d_in_pad = feat.shape
    waf, waa, ba = conv_p["waf"], conv_p["waa"], conv_p["ba"]
    r_stack = waf.shape[1]
    eff_cols = eff.shape[1]

    flops = (2 * n_pad * n_pad * d_pad
             + 2 * n_pad * (d_in_pad + d_pad) * r_stack)
    # adj streamed once; msg re-streamed once per destination-row tile;
    # destination-row operands and resident weights once.
    bytes_accessed = (adj.size * 2 + msg.size * 2 * (n_pad // tm)
                      + feat.size * 2 + eff.size * 4 + invdeg.size * 4
                      + (waf.size + waa.size) * 2 + ba.size * 4
                      + n_pad * d_pad * 2)
    cost = pl.CostEstimate(flops=int(flops), transcendentals=int(n_pad),
                           bytes_accessed=int(bytes_accessed))

    return pl.pallas_call(
        functools.partial(_aggregate_update_kernel, n_eff=n_eff, d_pad=d_pad),
        out_shape=jax.ShapeDtypeStruct((n_pad, d_pad), jnp.bfloat16),
        grid_spec=pltpu.PrefetchScalarGridSpec(
            num_scalar_prefetch=0,
            grid=(n_pad // tm, n_pad // tk),
            in_specs=[
                pl.BlockSpec((tm, eff_cols), lambda i, k: (i, 0)),     # eff (dst rows)
                pl.BlockSpec((tm, d_in_pad), lambda i, k: (i, 0)),     # feat (dst rows)
                pl.BlockSpec((tm, 1), lambda i, k: (i, 0)),            # 1/in_degree
                pl.BlockSpec((tm, tk), lambda i, k: (i, k)),           # adj counts tile
                pl.BlockSpec((tk, d_pad), lambda i, k: (k, 0)),        # precomputed msg
                pl.BlockSpec((d_in_pad, r_stack), lambda i, k: (0, 0)),  # W_agg_feat
                pl.BlockSpec((d_pad, r_stack), lambda i, k: (0, 0)),     # W_agg_aggr
                pl.BlockSpec((1, r_stack), lambda i, k: (0, 0)),         # b_agg
            ],
            out_specs=pl.BlockSpec((tm, d_pad), lambda i, k: (i, 0)),
            scratch_shapes=[pltpu.VMEM((tm, d_pad), jnp.float32)]),
        compiler_params=pltpu.CompilerParams(
            dimension_semantics=("parallel", "arbitrary"),
            vmem_limit_bytes=vmem_limit),
        cost_estimate=cost,
    )(eff, feat, invdeg, adj, msg, waf, waa, ba)


# -----------------------------------------------------------------------------
# Kernel 3: post_mp (Linear -> Dropout(identity) -> Linear) + log_softmax
# -----------------------------------------------------------------------------
def _post_mp_kernel(h_ref, w1_ref, b1_ref, w2_ref, b2_ref, out_ref):
    # TODO(synk): nn.Dropout / F.dropout are identity in inference mode.
    h1 = jnp.dot(h_ref[...], w1_ref[...],
                 preferred_element_type=jnp.float32) + b1_ref[...]
    y = jnp.dot(h1.astype(w2_ref.dtype), w2_ref[...],
                preferred_element_type=jnp.float32) + b2_ref[...]
    # padded logit columns carry a -1e30 f32 bias -> exp underflows to 0.
    m = jnp.max(y, axis=1, keepdims=True)
    z = y - m
    out_ref[...] = z - jnp.log(jnp.sum(jnp.exp(z), axis=1, keepdims=True))


def post_mp(h, post_p, *, tm, vmem_limit):
    n_pad, d_pad = h.shape
    w1, b1, w2, b2 = post_p["w1"], post_p["b1"], post_p["w2"], post_p["b2"]
    o_pad = w2.shape[1]

    cost = pl.CostEstimate(
        flops=int(2 * n_pad * d_pad * (d_pad + o_pad)),
        transcendentals=int(n_pad * (o_pad + 1)),
        bytes_accessed=int(h.size * 2 + (w1.size + w2.size) * 2
                           + (b1.size + b2.size) * 4 + n_pad * o_pad * 4))

    return pl.pallas_call(
        _post_mp_kernel,
        out_shape=jax.ShapeDtypeStruct((n_pad, o_pad), jnp.float32),
        grid_spec=pltpu.PrefetchScalarGridSpec(
            num_scalar_prefetch=0,
            grid=(n_pad // tm,),
            in_specs=[
                pl.BlockSpec((tm, d_pad), lambda i: (i, 0)),
                pl.BlockSpec((d_pad, d_pad), lambda i: (0, 0)),
                pl.BlockSpec((1, d_pad), lambda i: (0, 0)),
                pl.BlockSpec((d_pad, o_pad), lambda i: (0, 0)),
                pl.BlockSpec((1, o_pad), lambda i: (0, 0)),
            ],
            out_specs=pl.BlockSpec((tm, o_pad), lambda i: (i, 0))),
        compiler_params=pltpu.CompilerParams(
            dimension_semantics=("parallel",),
            vmem_limit_bytes=vmem_limit),
        cost_estimate=cost,
    )(h, w1, b1, w2, b2)


# -----------------------------------------------------------------------------
# Full forward
# -----------------------------------------------------------------------------
def gnn_stack_forward(x, edge_index, packed, *, n_roles, num_layers, output_dim):
    """Full GNNStack.forward (task='node', eval mode)."""
    n = x.shape[0]
    roles = x[:, :n_roles].astype(jnp.float32)
    feat = x[:, n_roles:].astype(jnp.float32)
    input_dim = feat.shape[1]

    n_eff = max(1, n_roles - 1)
    d_pad = packed["convs"][0]["waa"].shape[0]
    d_in0_pad = packed["convs"][0]["wm"].shape[0]

    n128 = _round_up(n, 128)
    tm, tk, vmem_limit = _choose_tiles(n128)
    n_pad = _round_up(n, max(tm, tk))

    # Effective role coefficients reproducing the reference's weighting loop
    # EXACTLY (role 0 double-counted; the last linear / last role column are
    # never used, so that weight block is dropped from packing entirely):
    #   R >= 2: c = [2*roles[:,0], roles[:,1], ..., roles[:,R-2]]
    #   R == 1: no role weighting at all.
    if n_roles == 1:
        eff = jnp.ones((n, 1), jnp.float32)
    else:
        scale = jnp.array([2.0] + [1.0] * (n_roles - 2), jnp.float32)
        eff = roles[:, :n_roles - 1] * scale[None, :]
    eff = jnp.pad(eff, ((0, n_pad - n), (0, 0)))

    feat_p = jnp.pad(feat, ((0, n_pad - n), (0, d_in0_pad - input_dim)))
    feat_p = feat_p.astype(jnp.bfloat16)

    # Dense 0/1 (multi-)edge-count adjacency for PyG aggr='mean':
    #   counts[i, j] = #edges(j -> i);  mean = (counts @ msg) / in_degree(i).
    # Counts are exact in bf16; the mean division happens in f32 in-kernel.
    # TODO(synk): for large sparse graphs replace the dense O(N^2) matrix with
    # an in-kernel CSR gather (scalar-prefetched offsets); an int8 (v5e/v6e) /
    # fp8 (v7x) count matrix would additionally halve the dominant HBM stream.
    src, dst = edge_index[0], edge_index[1]
    counts = jnp.zeros((n, n), jnp.float32).at[dst, src].add(1.0)
    deg = jnp.sum(counts, axis=1, keepdims=True)
    inv_deg = jnp.where(deg > 0, 1.0 / jnp.maximum(deg, 1.0), 0.0)
    adj = jnp.pad(counts, ((0, n_pad - n), (0, n_pad - n))).astype(jnp.bfloat16)
    inv_deg = jnp.pad(inv_deg, ((0, n_pad - n), (0, 0)))      # f32 [N_pad, 1]

    for layer in range(num_layers):
        # GNNStack's outer F.relu is a no-op (layer output is already >= 0),
        # F.dropout is identity in eval mode; roles are carried unchanged.
        conv_p = packed["convs"][layer]
        msg = message_pass(eff, feat_p, conv_p, n_eff=n_eff, d_pad=d_pad,
                           tm=tm, vmem_limit=vmem_limit)
        feat_p = aggregate_update(eff, feat_p, inv_deg, adj, msg, conv_p,
                                  n_eff=n_eff, d_pad=d_pad, tm=tm, tk=tk,
                                  vmem_limit=vmem_limit)

    out = post_mp(feat_p, packed["post"], tm=tm, vmem_limit=vmem_limit)
    return out[:n, :output_dim]


# -----------------------------------------------------------------------------
# Deterministic parameter init (mimics nn.Linear's U(-1/sqrt(fan_in), ...)) and
# packing into fused / padded / bf16 kernel weights.
# -----------------------------------------------------------------------------
def _init_linear(key, fan_in, fan_out):
    kw, kb = jax.random.split(key)
    bound = 1.0 / jnp.sqrt(jnp.float32(fan_in))
    w = jax.random.uniform(kw, (fan_in, fan_out), jnp.float32, -bound, bound)
    b = jax.random.uniform(kb, (1, fan_out), jnp.float32, -bound, bound)
    return w, b


def init_raw_params(key, input_dim, hidden_dim, output_dim, n_roles, num_layers):
    raw = {"convs": []}
    for layer in range(num_layers):
        d_in = input_dim if layer == 0 else hidden_dim
        wm, bm, waf, waa, ba = [], [], [], [], []
        for _ in range(n_roles):
            key, k1, k2 = jax.random.split(key, 3)
            w, b = _init_linear(k1, d_in, hidden_dim)                 # linears[r]
            wm.append(w); bm.append(b)
            wa, bb = _init_linear(k2, d_in + hidden_dim, hidden_dim)  # agg_list[r]
            waf.append(wa[:d_in]); waa.append(wa[d_in:]); ba.append(bb)
        raw["convs"].append({"wm": wm, "bm": bm, "waf": waf, "waa": waa,
                             "ba": ba, "d_in": d_in})
    key, k1, k2 = jax.random.split(key, 3)
    w1, b1 = _init_linear(k1, hidden_dim, hidden_dim)
    w2, b2 = _init_linear(k2, hidden_dim, output_dim)
    raw["post"] = {"w1": w1, "b1": b1, "w2": w2, "b2": b2}
    return raw


def pack_params(raw, hidden_dim, output_dim, n_roles):
    """Stack only the USED per-role linears into wide, 128-padded bf16 matmul
    weights (biases stay f32).  max(1, n_roles-1) role blocks are packed: the
    reference never uses the last linear (effective coefficient is zero)."""
    n_eff = max(1, n_roles - 1)
    d_pad = _round_up(hidden_dim, 128)
    o_pad = _round_up(output_dim, 128)
    packed = {"convs": []}
    for conv in raw["convs"]:
        d_in = conv["d_in"]
        d_in_pad = _round_up(d_in, 128)
        r_stack = n_eff * d_pad
        wm = jnp.zeros((d_in_pad, r_stack), jnp.float32)
        bm = jnp.zeros((1, r_stack), jnp.float32)
        waf = jnp.zeros((d_in_pad, r_stack), jnp.float32)
        waa = jnp.zeros((d_pad, r_stack), jnp.float32)
        ba = jnp.zeros((1, r_stack), jnp.float32)
        for r in range(n_eff):
            c = r * d_pad
            wm = wm.at[:d_in, c:c + hidden_dim].set(conv["wm"][r])
            bm = bm.at[:, c:c + hidden_dim].set(conv["bm"][r])
            waf = waf.at[:d_in, c:c + hidden_dim].set(conv["waf"][r])
            waa = waa.at[:hidden_dim, c:c + hidden_dim].set(conv["waa"][r])
            ba = ba.at[:, c:c + hidden_dim].set(conv["ba"][r])
        packed["convs"].append({
            "wm": wm.astype(jnp.bfloat16), "bm": bm,
            "waf": waf.astype(jnp.bfloat16), "waa": waa.astype(jnp.bfloat16),
            "ba": ba})
    w1 = jnp.zeros((d_pad, d_pad), jnp.float32).at[:hidden_dim, :hidden_dim].set(raw["post"]["w1"])
    b1 = jnp.zeros((1, d_pad), jnp.float32).at[:, :hidden_dim].set(raw["post"]["b1"])
    w2 = jnp.zeros((d_pad, o_pad), jnp.float32).at[:hidden_dim, :output_dim].set(raw["post"]["w2"])
    # padded logit columns get a huge negative F32 bias so log_softmax ignores
    # them (kept f32 on purpose: a bf16 downcast would turn it into -inf).
    b2 = jnp.full((1, o_pad), -1e30, jnp.float32).at[:, :output_dim].set(raw["post"]["b2"])
    packed["post"] = {"w1": w1.astype(jnp.bfloat16), "b1": b1,
                      "w2": w2.astype(jnp.bfloat16), "b2": b2}
    return packed


# -----------------------------------------------------------------------------
if __name__ == "__main__":
    N_NODES = 16
    N_ROLES = 3
    INPUT_DIM = 32    # feature part; data.x has N_ROLES + INPUT_DIM columns
    HIDDEN_DIM = 32
    OUTPUT_DIM = 8
    NUM_LAYERS = 2
    N_EDGES = 48

    root = jax.random.PRNGKey(0)
    k_x, k_e, k_p = jax.random.split(root, 3)

    x = jax.random.normal(k_x, (N_NODES, N_ROLES + INPUT_DIM), jnp.float32)
    edge_index = jax.random.randint(k_e, (2, N_EDGES), 0, N_NODES, jnp.int32)

    raw = init_raw_params(k_p, INPUT_DIM, HIDDEN_DIM, OUTPUT_DIM, N_ROLES, NUM_LAYERS)
    packed = pack_params(raw, HIDDEN_DIM, OUTPUT_DIM, N_ROLES)

    fwd = jax.jit(functools.partial(gnn_stack_forward, n_roles=N_ROLES,
                                    num_layers=NUM_LAYERS, output_dim=OUTPUT_DIM))
    out = jax.block_until_ready(fwd(x, edge_index, packed))

    assert out.shape == (N_NODES, OUTPUT_DIM)
    # log_softmax rows must sum (in prob space) to ~1
    assert bool(jnp.all(jnp.abs(jnp.sum(jnp.exp(out), axis=1) - 1.0) < 1e-4))
    print("KERNEL_OK")
</pallas_src>

<mosaic_0001>
module attributes {stable_mosaic.version = 11 : i64} {
  func.func @_message_kernel(%arg0: i32, %arg1: memref<128x2xf32, #tpu.memory_space<vmem>>, %arg2: memref<128x128xbf16, #tpu.memory_space<vmem>>, %arg3: memref<128x256xbf16, #tpu.memory_space<vmem>>, %arg4: memref<1x256xf32, #tpu.memory_space<vmem>>, %arg5: memref<128x128xbf16, #tpu.memory_space<vmem>>) attributes {dimension_semantics = [#tpu.dimension_semantics<parallel>], iteration_bounds = array<i64: 1>, scalar_prefetch = 0 : i64, scratch_operands = 0 : i64, tpu.core_type = #tpu.core_type<tc>, window_params = [{transform_indices = @transform_0, window_bounds = array<i64: 128, 2>}, {transform_indices = @transform_1, window_bounds = array<i64: 128, 128>}, {pipeline_mode = #tpu.pipeline_mode<synchronous>, transform_indices = @transform_2, window_bounds = array<i64: 128, 256>}, {pipeline_mode = #tpu.pipeline_mode<synchronous>, transform_indices = @transform_3, window_bounds = array<i64: 1, 256>}, {transform_indices = @transform_4, window_bounds = array<i64: 128, 128>}]} {
    %c0 = arith.constant 0 : index
    %c0_0 = arith.constant 0 : index
    %0 = vector.load %arg2[%c0, %c0_0] : memref<128x128xbf16, #tpu.memory_space<vmem>>, vector<128x128xbf16>
    %c0_1 = arith.constant 0 : index
    %c0_2 = arith.constant 0 : index
    %1 = vector.load %arg3[%c0_1, %c0_2] : memref<128x256xbf16, #tpu.memory_space<vmem>>, vector<128x256xbf16>
    %cst = arith.constant dense<0.000000e+00> : vector<128x256xf32>
    %2 = tpu.matmul %0, %1, %cst {dimension_numbers = #tpu.dot_dimension_numbers<[1], [0], [0], [1], [0, 0, 1, 1], [], []>} : vector<128x128xbf16>, vector<128x256xbf16>, vector<128x256xf32> -> vector<128x256xf32>
    %c0_3 = arith.constant 0 : index
    %c0_4 = arith.constant 0 : index
    %3 = vector.load %arg4[%c0_3, %c0_4] : memref<1x256xf32, #tpu.memory_space<vmem>>, vector<1x256xf32>
    %4 = vector.broadcast %3 : vector<1x256xf32> to vector<128x256xf32>
    %5 = arith.addf %2, %4 : vector<128x256xf32>
    %c0_5 = arith.constant 0 : index
    %c0_6 = arith.constant 0 : index
    %6 = vector.load %arg1[%c0_5, %c0_6] : memref<128x2xf32, #tpu.memory_space<vmem>>, vector<128x2xf32>
    %7 = vector.extract_strided_slice %6 {offsets = [0, 0], sizes = [128, 1], strides = [1, 1]} : vector<128x2xf32> to vector<128x1xf32>
    %8 = vector.extract_strided_slice %5 {offsets = [0, 0], sizes = [128, 128], strides = [1, 1]} : vector<128x256xf32> to vector<128x128xf32>
    %9 = vector.broadcast %7 : vector<128x1xf32> to vector<128x128xf32>
    %10 = arith.mulf %9, %8 : vector<128x128xf32>
    %11 = vector.extract_strided_slice %6 {offsets = [0, 1], sizes = [128, 1], strides = [1, 1]} : vector<128x2xf32> to vector<128x1xf32>
    %12 = vector.extract_strided_slice %5 {offsets = [0, 128], sizes = [128, 128], strides = [1, 1]} : vector<128x256xf32> to vector<128x128xf32>
    %13 = vector.broadcast %11 : vector<128x1xf32> to vector<128x128xf32>
    %14 = arith.mulf %13, %12 : vector<128x128xf32>
    %15 = arith.addf %10, %14 : vector<128x128xf32>
    %cst_7 = arith.constant 0.000000e+00 : f32
    %16 = vector.broadcast %cst_7 : f32 to vector<128x128xf32>
    %17 = arith.maximumf %15, %16 : vector<128x128xf32>
    %18 = arith.truncf %17 : vector<128x128xf32> to vector<128x128xbf16>
    %c0_8 = arith.constant 0 : index
    %c0_9 = arith.constant 0 : index
    %19 = vector.load %arg5[%c0_8, %c0_9] : memref<128x128xbf16, #tpu.memory_space<vmem>>, vector<128x128xbf16>
    tpu.vector_store %arg5[%c0_8, %c0_9], %18 {strides = array<i32>} : memref<128x128xbf16, #tpu.memory_space<vmem>>, vector<128x128xbf16>,
    return
  }
  func.func @transform_0(%arg0: i32) -> (i32, i32) {
    %c0_i32 = arith.constant 0 : i32
    %c0_i32_0 = arith.constant 0 : i32
    return %arg0, %c0_i32 : i32, i32
  }
  func.func @transform_1(%arg0: i32) -> (i32, i32) {
    %c0_i32 = arith.constant 0 : i32
    %c0_i32_0 = arith.constant 0 : i32
    return %arg0, %c0_i32 : i32, i32
  }
  func.func @transform_2(%arg0: i32) -> (i32, i32) {
    %c0_i32 = arith.constant 0 : i32
    %c0_i32_0 = arith.constant 0 : i32
    %c0_i32_1 = arith.constant 0 : i32
    return %c0_i32, %c0_i32_0 : i32, i32
  }
  func.func @transform_3(%arg0: i32) -> (i32, i32) {
    %c0_i32 = arith.constant 0 : i32
    %c0_i32_0 = arith.constant 0 : i32
    %c0_i32_1 = arith.constant 0 : i32
    return %c0_i32, %c0_i32_0 : i32, i32
  }
  func.func @transform_4(%arg0: i32) -> (i32, i32) {
    %c0_i32 = arith.constant 0 : i32
    %c0_i32_0 = arith.constant 0 : i32
    return %arg0, %c0_i32 : i32, i32
  }
}

module attributes {stable_mosaic.version = 11 : i64} {
  func.func @_post_mp_kernel(%arg0: i32, %arg1: memref<128x128xbf16, #tpu.memory_space<vmem>>, %arg2: memref<128x128xbf16, #tpu.memory_space<vmem>>, %arg3: memref<1x128xf32, #tpu.memory_space<vmem>>, %arg4: memref<128x128xbf16, #tpu.memory_space<vmem>>, %arg5: memref<1x128xf32, #tpu.memory_space<vmem>>, %arg6: memref<128x128xf32, #tpu.memory_space<vmem>>) attributes {dimension_semantics = [#tpu.dimension_semantics<parallel>], iteration_bounds = array<i64: 1>, scalar_prefetch = 0 : i64, scratch_operands = 0 : i64, tpu.core_type = #tpu.core_type<tc>, window_params = [{transform_indices = @transform_0, window_bounds = array<i64: 128, 128>}, {pipeline_mode = #tpu.pipeline_mode<synchronous>, transform_indices = @transform_1, window_bounds = array<i64: 128, 128>}, {pipeline_mode = #tpu.pipeline_mode<synchronous>, transform_indices = @transform_2, window_bounds = array<i64: 1, 128>}, {pipeline_mode = #tpu.pipeline_mode<synchronous>, transform_indices = @transform_3, window_bounds = array<i64: 128, 128>}, {pipeline_mode = #tpu.pipeline_mode<synchronous>, transform_indices = @transform_4, window_bounds = array<i64: 1, 128>}, {transform_indices = @transform_5, window_bounds = array<i64: 128, 128>}]} {
    %c0 = arith.constant 0 : index
    %c0_0 = arith.constant 0 : index
    %0 = vector.load %arg1[%c0, %c0_0] : memref<128x128xbf16, #tpu.memory_space<vmem>>, vector<128x128xbf16>
    %c0_1 = arith.constant 0 : index
    %c0_2 = arith.constant 0 : index
    %1 = vector.load %arg2[%c0_1, %c0_2] : memref<128x128xbf16, #tpu.memory_space<vmem>>, vector<128x128xbf16>
    %cst = arith.constant dense<0.000000e+00> : vector<128x128xf32>
    %2 = tpu.matmul %0, %1, %cst {dimension_numbers = #tpu.dot_dimension_numbers<[1], [0], [0], [1], [0, 0, 1, 1], [], []>} : vector<128x128xbf16>, vector<128x128xbf16>, vector<128x128xf32> -> vector<128x128xf32>
    %c0_3 = arith.constant 0 : index
    %c0_4 = arith.constant 0 : index
    %3 = vector.load %arg3[%c0_3, %c0_4] : memref<1x128xf32, #tpu.memory_space<vmem>>, vector<1x128xf32>
    %4 = vector.broadcast %3 : vector<1x128xf32> to vector<128x128xf32>
    %5 = arith.addf %2, %4 : vector<128x128xf32>
    %6 = arith.truncf %5 : vector<128x128xf32> to vector<128x128xbf16>
    %c0_5 = arith.constant 0 : index
    %c0_6 = arith.constant 0 : index
    %7 = vector.load %arg4[%c0_5, %c0_6] : memref<128x128xbf16, #tpu.memory_space<vmem>>, vector<128x128xbf16>
    %cst_7 = arith.constant dense<0.000000e+00> : vector<128x128xf32>
    %8 = tpu.matmul %6, %7, %cst_7 {dimension_numbers = #tpu.dot_dimension_numbers<[1], [0], [0], [1], [0, 0, 1, 1], [], []>} : vector<128x128xbf16>, vector<128x128xbf16>, vector<128x128xf32> -> vector<128x128xf32>
    %c0_8 = arith.constant 0 : index
    %c0_9 = arith.constant 0 : index
    %9 = vector.load %arg5[%c0_8, %c0_9] : memref<1x128xf32, #tpu.memory_space<vmem>>, vector<1x128xf32>
    %10 = vector.broadcast %9 : vector<1x128xf32> to vector<128x128xf32>
    %11 = arith.addf %8, %10 : vector<128x128xf32>
    %cst_10 = arith.constant dense<0xFF800000> : vector<128xf32>
    %12 = vector.multi_reduction <maximumf>, %11, %cst_10 [1] : vector<128x128xf32> to vector<128xf32>
    %13 = vector.shape_cast %12 : vector<128xf32> to vector<128x1xf32>
    %14 = vector.broadcast %13 : vector<128x1xf32> to vector<128x128xf32>
    %15 = arith.subf %11, %14 : vector<128x128xf32>
    %16 = math.exp %15 : vector<128x128xf32>
    %cst_11 = arith.constant dense<0.000000e+00> : vector<128xf32>
    %17 = vector.multi_reduction <add>, %16, %cst_11 [1] : vector<128x128xf32> to vector<128xf32>
    %18 = vector.shape_cast %17 : vector<128xf32> to vector<128x1xf32>
    %19 = math.log %18 : vector<128x1xf32>
    %20 = vector.broadcast %19 : vector<128x1xf32> to vector<128x128xf32>
    %21 = arith.subf %15, %20 : vector<128x128xf32>
    %c0_12 = arith.constant 0 : index
    %c0_13 = arith.constant 0 : index
    %22 = vector.load %arg6[%c0_12, %c0_13] : memref<128x128xf32, #tpu.memory_space<vmem>>, vector<128x128xf32>
    tpu.vector_store %arg6[%c0_12, %c0_13], %21 {strides = array<i32>} : memref<128x128xf32, #tpu.memory_space<vmem>>, vector<128x128xf32>,
    return
  }
  func.func @transform_0(%arg0: i32) -> (i32, i32) {
    %c0_i32 = arith.constant 0 : i32
    %c0_i32_0 = arith.constant 0 : i32
    return %arg0, %c0_i32 : i32, i32
  }
  func.func @transform_1(%arg0: i32) -> (i32, i32) {
    %c0_i32 = arith.constant 0 : i32
    %c0_i32_0 = arith.constant 0 : i32
    %c0_i32_1 = arith.constant 0 : i32
    return %c0_i32, %c0_i32_0 : i32, i32
  }
  func.func @transform_2(%arg0: i32) -> (i32, i32) {
    %c0_i32 = arith.constant 0 : i32
    %c0_i32_0 = arith.constant 0 : i32
    %c0_i32_1 = arith.constant 0 : i32
    return %c0_i32, %c0_i32_0 : i32, i32
  }
  func.func @transform_3(%arg0: i32) -> (i32, i32) {
    %c0_i32 = arith.constant 0 : i32
    %c0_i32_0 = arith.constant 0 : i32
    %c0_i32_1 = arith.constant 0 : i32
    return %c0_i32, %c0_i32_0 : i32, i32
  }
  func.func @transform_4(%arg0: i32) -> (i32, i32) {
    %c0_i32 = arith.constant 0 : i32
    %c0_i32_0 = arith.constant 0 : i32
    %c0_i32_1 = arith.constant 0 : i32
    return %c0_i32, %c0_i32_0 : i32, i32
  }
  func.func @transform_5(%arg0: i32) -> (i32, i32) {
    %c0_i32 = arith.constant 0 : i32
    %c0_i32_0 = arith.constant 0 : i32
    return %arg0, %c0_i32 : i32, i32
  }
}

module attributes {stable_mosaic.version = 11 : i64} {
  func.func @_aggregate_update_kernel(%arg0: i32, %arg1: i32, %arg2: memref<128x2xf32, #tpu.memory_space<vmem>>, %arg3: memref<128x128xbf16, #tpu.memory_space<vmem>>, %arg4: memref<128x1xf32, #tpu.memory_space<vmem>>, %arg5: memref<128x128xbf16, #tpu.memory_space<vmem>>, %arg6: memref<128x128xbf16, #tpu.memory_space<vmem>>, %arg7: memref<128x256xbf16, #tpu.memory_space<vmem>>, %arg8: memref<128x256xbf16, #tpu.memory_space<vmem>>, %arg9: memref<1x256xf32, #tpu.memory_space<vmem>>, %arg10: memref<128x128xbf16, #tpu.memory_space<vmem>>, %arg11: memref<128x128xf32, #tpu.memory_space<vmem>>) attributes {dimension_semantics = [#tpu.dimension_semantics<parallel>, #tpu.dimension_semantics<arbitrary>], iteration_bounds = array<i64: 1, 1>, scalar_prefetch = 0 : i64, scratch_operands = 1 : i64, tpu.core_type = #tpu.core_type<tc>, window_params = [{transform_indices = @transform_0, window_bounds = array<i64: 128, 2>}, {transform_indices = @transform_1, window_bounds = array<i64: 128, 128>}, {transform_indices = @transform_2, window_bounds = array<i64: 128, 1>}, {transform_indices = @transform_3, window_bounds = array<i64: 128, 128>}, {transform_indices = @transform_4, window_bounds = array<i64: 128, 128>}, {pipeline_mode = #tpu.pipeline_mode<synchronous>, transform_indices = @transform_5, window_bounds = array<i64: 128, 256>}, {pipeline_mode = #tpu.pipeline_mode<synchronous>, transform_indices = @transform_6, window_bounds = array<i64: 128, 256>}, {pipeline_mode = #tpu.pipeline_mode<synchronous>, transform_indices = @transform_7, window_bounds = array<i64: 1, 256>}, {transform_indices = @transform_8, window_bounds = array<i64: 128, 128>}]} {
    %c0_i32 = arith.constant 0 : i32
    %0 = arith.cmpi eq, %arg1, %c0_i32 : i32
    %1 = arith.extui %0 : i1 to i32
    %c0_i32_0 = arith.constant 0 : i32
    %2 = arith.cmpi ne, %1, %c0_i32_0 : i32
    scf.if %2 {
      %cst_10 = arith.constant 0.000000e+00 : f32
      %12 = vector.broadcast %cst_10 : f32 to vector<128x128xf32>
      %c0_11 = arith.constant 0 : index
      %c0_12 = arith.constant 0 : index
      %13 = vector.load %arg11[%c0_11, %c0_12] : memref<128x128xf32, #tpu.memory_space<vmem>>, vector<128x128xf32>
      tpu.vector_store %arg11[%c0_11, %c0_12], %12 {strides = array<i32>} : memref<128x128xf32, #tpu.memory_space<vmem>>, vector<128x128xf32>,
    } else {
    }
    %c0 = arith.constant 0 : index
    %c0_1 = arith.constant 0 : index
    %3 = vector.load %arg11[%c0, %c0_1] : memref<128x128xf32, #tpu.memory_space<vmem>>, vector<128x128xf32>
    %c0_2 = arith.constant 0 : index
    %c0_3 = arith.constant 0 : index
    %4 = vector.load %arg5[%c0_2, %c0_3] : memref<128x128xbf16, #tpu.memory_space<vmem>>, vector<128x128xbf16>
    %c0_4 = arith.constant 0 : index
    %c0_5 = arith.constant 0 : index
    %5 = vector.load %arg6[%c0_4, %c0_5] : memref<128x128xbf16, #tpu.memory_space<vmem>>, vector<128x128xbf16>
    %cst = arith.constant dense<0.000000e+00> : vector<128x128xf32>
    %6 = tpu.matmul %4, %5, %cst {dimension_numbers = #tpu.dot_dimension_numbers<[1], [0], [0], [1], [0, 0, 1, 1], [], []>} : vector<128x128xbf16>, vector<128x128xbf16>, vector<128x128xf32> -> vector<128x128xf32>
    %7 = arith.addf %3, %6 : vector<128x128xf32>
    %c0_6 = arith.constant 0 : index
    %c0_7 = arith.constant 0 : index
    %8 = vector.load %arg11[%c0_6, %c0_7] : memref<128x128xf32, #tpu.memory_space<vmem>>, vector<128x128xf32>
    tpu.vector_store %arg11[%c0_6, %c0_7], %7 {strides = array<i32>} : memref<128x128xf32, #tpu.memory_space<vmem>>, vector<128x128xf32>,
    %c0_i32_8 = arith.constant 0 : i32
    %9 = arith.cmpi eq, %arg1, %c0_i32_8 : i32
    %10 = arith.extui %9 : i1 to i32
    %c0_i32_9 = arith.constant 0 : i32
    %11 = arith.cmpi ne, %10, %c0_i32_9 : i32
    scf.if %11 {
      %c0_10 = arith.constant 0 : index
      %c0_11 = arith.constant 0 : index
      %12 = vector.load %arg11[%c0_10, %c0_11] : memref<128x128xf32, #tpu.memory_space<vmem>>, vector<128x128xf32>
      %c0_12 = arith.constant 0 : index
      %c0_13 = arith.constant 0 : index
      %13 = vector.load %arg4[%c0_12, %c0_13] : memref<128x1xf32, #tpu.memory_space<vmem>>, vector<128x1xf32>
      %14 = vector.broadcast %13 : vector<128x1xf32> to vector<128x128xf32>
      %15 = arith.mulf %12, %14 : vector<128x128xf32>
      %c0_14 = arith.constant 0 : index
      %c0_15 = arith.constant 0 : index
      %16 = vector.load %arg3[%c0_14, %c0_15] : memref<128x128xbf16, #tpu.memory_space<vmem>>, vector<128x128xbf16>
      %c0_16 = arith.constant 0 : index
      %c0_17 = arith.constant 0 : index
      %17 = vector.load %arg7[%c0_16, %c0_17] : memref<128x256xbf16, #tpu.memory_space<vmem>>, vector<128x256xbf16>
      %cst_18 = arith.constant dense<0.000000e+00> : vector<128x256xf32>
      %18 = tpu.matmul %16, %17, %cst_18 {dimension_numbers = #tpu.dot_dimension_numbers<[1], [0], [0], [1], [0, 0, 1, 1], [], []>} : vector<128x128xbf16>, vector<128x256xbf16>, vector<128x256xf32> -> vector<128x256xf32>
      %19 = arith.truncf %15 : vector<128x128xf32> to vector<128x128xbf16>
      %c0_19 = arith.constant 0 : index
      %c0_20 = arith.constant 0 : index
      %20 = vector.load %arg8[%c0_19, %c0_20] : memref<128x256xbf16, #tpu.memory_space<vmem>>, vector<128x256xbf16>
      %cst_21 = arith.constant dense<0.000000e+00> : vector<128x256xf32>
      %21 = tpu.matmul %19, %20, %cst_21 {dimension_numbers = #tpu.dot_dimension_numbers<[1], [0], [0], [1], [0, 0, 1, 1], [], []>} : vector<128x128xbf16>, vector<128x256xbf16>, vector<128x256xf32> -> vector<128x256xf32>
      %22 = arith.addf %18, %21 : vector<128x256xf32>
      %c0_22 = arith.constant 0 : index
      %c0_23 = arith.constant 0 : index
      %23 = vector.load %arg9[%c0_22, %c0_23] : memref<1x256xf32, #tpu.memory_space<vmem>>, vector<1x256xf32>
      %24 = vector.broadcast %23 : vector<1x256xf32> to vector<128x256xf32>
      %25 = arith.addf %22, %24 : vector<128x256xf32>
      %c0_24 = arith.constant 0 : index
      %c0_25 = arith.constant 0 : index
      %26 = vector.load %arg2[%c0_24, %c0_25] : memref<128x2xf32, #tpu.memory_space<vmem>>, vector<128x2xf32>
      %27 = vector.extract_strided_slice %26 {offsets = [0, 0], sizes = [128, 1], strides = [1, 1]} : vector<128x2xf32> to vector<128x1xf32>
      %28 = vector.extract_strided_slice %25 {offsets = [0, 0], sizes = [128, 128], strides = [1, 1]} : vector<128x256xf32> to vector<128x128xf32>
      %29 = vector.broadcast %27 : vector<128x1xf32> to vector<128x128xf32>
      %30 = arith.mulf %29, %28 : vector<128x128xf32>
      %31 = vector.extract_strided_slice %26 {offsets = [0, 1], sizes = [128, 1], strides = [1, 1]} : vector<128x2xf32> to vector<128x1xf32>
      %32 = vector.extract_strided_slice %25 {offsets = [0, 128], sizes = [128, 128], strides = [1, 1]} : vector<128x256xf32> to vector<128x128xf32>
      %33 = vector.broadcast %31 : vector<128x1xf32> to vector<128x128xf32>
      %34 = arith.mulf %33, %32 : vector<128x128xf32>
      %35 = arith.addf %30, %34 : vector<128x128xf32>
      %cst_26 = arith.constant 0.000000e+00 : f32
      %36 = vector.broadcast %cst_26 : f32 to vector<128x128xf32>
      %37 = arith.maximumf %35, %36 : vector<128x128xf32>
      %38 = arith.mulf %37, %37 : vector<128x128xf32>
      %cst_27 = arith.constant dense<0.000000e+00> : vector<128xf32>
      %39 = vector.multi_reduction <add>, %38, %cst_27 [1] : vector<128x128xf32> to vector<128xf32>
      %40 = vector.shape_cast %39 : vector<128xf32> to vector<128x1xf32>
      %cst_28 = arith.constant 1.000000e-24 : f32
      %41 = vector.broadcast %cst_28 : f32 to vector<128x1xf32>
      %42 = arith.maximumf %40, %41 : vector<128x1xf32>
      %43 = math.rsqrt %42 : vector<128x1xf32>
      %44 = vector.broadcast %43 : vector<128x1xf32> to vector<128x128xf32>
      %45 = arith.mulf %37, %44 : vector<128x128xf32>
      %46 = arith.truncf %45 : vector<128x128xf32> to vector<128x128xbf16>
      %c0_29 = arith.constant 0 : index
      %c0_30 = arith.constant 0 : index
      %47 = vector.load %arg10[%c0_29, %c0_30] : memref<128x128xbf16, #tpu.memory_space<vmem>>, vector<128x128xbf16>
      tpu.vector_store %arg10[%c0_29, %c0_30], %46 {strides = array<i32>} : memref<128x128xbf16, #tpu.memory_space<vmem>>, vector<128x128xbf16>,
    } else {
    }
    return
  }
  func.func @transform_0(%arg0: i32, %arg1: i32) -> (i32, i32) {
    %c0_i32 = arith.constant 0 : i32
    %c0_i32_0 = arith.constant 0 : i32
    return %arg0, %c0_i32 : i32, i32
  }
  func.func @transform_1(%arg0: i32, %arg1: i32) -> (i32, i32) {
    %c0_i32 = arith.constant 0 : i32
    %c0_i32_0 = arith.constant 0 : i32
    return %arg0, %c0_i32 : i32, i32
  }
  func.func @transform_2(%arg0: i32, %arg1: i32) -> (i32, i32) {
    %c0_i32 = arith.constant 0 : i32
    %c0_i32_0 = arith.constant 0 : i32
    return %arg0, %c0_i32 : i32, i32
  }
  func.func @transform_3(%arg0: i32, %arg1: i32) -> (i32, i32) {
    %c0_i32 = arith.constant 0 : i32
    return %arg0, %arg1 : i32, i32
  }
  func.func @transform_4(%arg0: i32, %arg1: i32) -> (i32, i32) {
    %c0_i32 = arith.constant 0 : i32
    %c0_i32_0 = arith.constant 0 : i32
    return %arg1, %c0_i32 : i32, i32
  }
  func.func @transform_5(%arg0: i32, %arg1: i32) -> (i32, i32) {
    %c0_i32 = arith.constant 0 : i32
    %c0_i32_0 = arith.constant 0 : i32
    %c0_i32_1 = arith.constant 0 : i32
    return %c0_i32, %c0_i32_0 : i32, i32
  }
  func.func @transform_6(%arg0: i32, %arg1: i32) -> (i32, i32) {
    %c0_i32 = arith.constant 0 : i32
    %c0_i32_0 = arith.constant 0 : i32
    %c0_i32_1 = arith.constant 0 : i32
    return %c0_i32, %c0_i32_0 : i32, i32
  }
  func.func @transform_7(%arg0: i32, %arg1: i32) -> (i32, i32) {
    %c0_i32 = arith.constant 0 : i32
    %c0_i32_0 = arith.constant 0 : i32
    %c0_i32_1 = arith.constant 0 : i32
    return %c0_i32, %c0_i32_0 : i32, i32
  }
  func.func @transform_8(%arg0: i32, %arg1: i32) -> (i32, i32) {
    %c0_i32 = arith.constant 0 : i32
    %c0_i32_0 = arith.constant 0 : i32
    return %arg0, %c0_i32 : i32, i32
  }
}

</mosaic_0001>

<llo_original>
// kernel: gnn_stack_forward.5
$region0: #{gnn_stack_forward.5}
  #allocation0 [shape = 'u32[]', space=smem, size = 0x4, offset = 0x4, fixed_abs, tag = 'smem constant byte address 0x4 - core index']
  #allocation1 [shape = 'u32[72,128]{1,0:T(1,128)}', space=vmem, size = 0x9000, scoped, tag = 'internal scratch']
  %s0 = inlined_call_operand.vmem [shape: f32[128,2], index: 0, kind: input, shape index: {}]
  %s1 = inlined_call_operand.vmem [shape: bf16[128,128], index: 1, kind: input, shape index: {}]
  %s2 = inlined_call_operand.vmem [shape: bf16[128,256], index: 2, kind: input, shape index: {}]
  %s3 = inlined_call_operand.vmem [shape: f32[1,256], index: 3, kind: input, shape index: {}]
  %s4 = inlined_call_operand.vmem [shape: bf16[128,128], index: 4, kind: output, shape index: {}]
  %s5 = sld [smem:[#allocation0]]
  $region26: #{gnn_stack_forward.5} parent=0
    _
  %s7 = ssub.s32 1, %s5
  %s8 = scalar_select 0, %s7, %s5
  // Predicated region
  $region2: #{gnn_stack_forward.5} parent=0 // pred_check
    _
  $region3: #{gnn_stack_forward.5} parent=0 // pred_check_branch
    %10 = sbr.rel (0) target = $region5
  $region4: #{gnn_stack_forward.5} parent=0 // pred_region
    _
  $region5: #{gnn_stack_forward.5} parent=0 // pred_fallthru
    _
  // Predicated region
  $region6: #{gnn_stack_forward.5} parent=0 // pred_check
    _
  $region7: #{gnn_stack_forward.5} parent=0 // pred_check_branch
    %12 = sbr.rel (0) target = $region9
  $region8: #{gnn_stack_forward.5} parent=0 // pred_region
    _
  $region9: #{gnn_stack_forward.5} parent=0 // pred_fallthru
    _
  // Predicated region
  $region10: #{gnn_stack_forward.5} parent=0 // pred_check
    _
  $region11: #{gnn_stack_forward.5} parent=0 // pred_check_branch
    %14 = sbr.rel (0) target = $region13
  $region12: #{gnn_stack_forward.5} parent=0 // pred_region
    _
  $region13: #{gnn_stack_forward.5} parent=0 // pred_fallthru
    _
  // Predicated region
  $region14: #{gnn_stack_forward.5} parent=0 // pred_check
    _
  $region15: #{gnn_stack_forward.5} parent=0 // pred_check_branch
    %16 = sbr.rel (0) target = $region17
  $region16: #{gnn_stack_forward.5} parent=0 // pred_region
    _
  $region17: #{gnn_stack_forward.5} parent=0 // pred_fallthru
    _
  %v17 = vld [vmem:[%s1] sm:$0xf]
  %v18 = vld [vmem:[%s1 + $0x4] sm:$0xf]
  %v19 = vld [vmem:[%s1 + $0x8] sm:$0xf]
  %v20 = vld [vmem:[%s1 + $0xc] sm:$0xf]
  %v21 = vld [vmem:[%s1 + $0x10] sm:$0xf]
  %v22 = vld [vmem:[%s1 + $0x14] sm:$0xf]
  %v23 = vld [vmem:[%s1 + $0x18] sm:$0xf]
  %v24 = vld [vmem:[%s1 + $0x1c] sm:$0xf]
  %v25 = vld [vmem:[%s1 + $0x20] sm:$0xf]
  %v26 = vld [vmem:[%s1 + $0x24] sm:$0xf]
  %v27 = vld [vmem:[%s1 + $0x28] sm:$0xf]
  %v28 = vld [vmem:[%s1 + $0x2c] sm:$0xf]
  %v29 = vld [vmem:[%s1 + $0x30] sm:$0xf]
  %v30 = vld [vmem:[%s1 + $0x34] sm:$0xf]
  %v31 = vld [vmem:[%s1 + $0x38] sm:$0xf]
  %v32 = vld [vmem:[%s1 + $0x3c] sm:$0xf]
  %v33 = vld [vmem:[%s2] sm:$0xff]
  %v34 = vld [vmem:[%s2 + $0x8] sm:$0xff]
  %v35 = vld [vmem:[%s2 + $0x10] sm:$0xff]
  %v36 = vld [vmem:[%s2 + $0x18] sm:$0xff]
  %v37 = vld [vmem:[%s2 + $0x20] sm:$0xff]
  %v38 = vld [vmem:[%s2 + $0x28] sm:$0xff]
  %v39 = vld [vmem:[%s2 + $0x30] sm:$0xff]
  %v40 = vld [vmem:[%s2 + $0x38] sm:$0xff]
  %v41 = vld [vmem:[%s2 + $0x40] sm:$0xff]
  %v42 = vld [vmem:[%s2 + $0x48] sm:$0xff]
  %v43 = vld [vmem:[%s2 + $0x50] sm:$0xff]
  %v44 = vld [vmem:[%s2 + $0x58] sm:$0xff]
  %v45 = vld [vmem:[%s2 + $0x60] sm:$0xff]
  %v46 = vld [vmem:[%s2 + $0x68] sm:$0xff]
  %v47 = vld [vmem:[%s2 + $0x70] sm:$0xff]
  %v48 = vld [vmem:[%s2 + $0x78] sm:$0xff]
  %v49 = vld [vmem:[%s3] sm:$0x3]
  %v51 = vperm.slane %v49, 0
  %v52 = vperm.slane %v49, 1
  %v71 = vunpack.c.l.b16 %v17
  %v72 = vunpack.c.l.b16 %v18
  %v73 = vunpack.c.l.b16 %v19
  %v74 = vunpack.c.l.b16 %v20
  %v75 = vunpack.c.l.b16 %v21
  %v76 = vunpack.c.l.b16 %v22
  %v77 = vunpack.c.l.b16 %v23
  %v78 = vunpack.c.l.b16 %v24
  %v79 = vunpack.c.l.b16 %v25
  %v80 = vunpack.c.l.b16 %v26
  %v81 = vunpack.c.l.b16 %v27
  %v82 = vunpack.c.l.b16 %v28
  %v83 = vunpack.c.l.b16 %v29
  %v84 = vunpack.c.l.b16 %v30
  %v85 = vunpack.c.l.b16 %v31
  %v86 = vunpack.c.l.b16 %v32
  %v87 = vpack.c.b16 %v72, %v71
  %v88 = vpack.c.b16 %v74, %v73
  %v89 = vpack.c.b16 %v76, %v75
  %v90 = vpack.c.b16 %v78, %v77
  %v91 = vpack.c.b16 %v80, %v79
  %v92 = vpack.c.b16 %v82, %v81
  %v93 = vpack.c.b16 %v84, %v83
  %v94 = vpack.c.b16 %v86, %v85
  %v119 = vunpack.c.l.b16 %v33
  %v120 = vunpack.c.h.b16 %v33
  %v121 = vunpack.c.l.b16 %v34
  %v122 = vunpack.c.h.b16 %v34
  %v123 = vunpack.c.l.b16 %v35
  %v124 = vunpack.c.h.b16 %v35
  %v125 = vunpack.c.l.b16 %v36
  %v126 = vunpack.c.h.b16 %v36
  %v127 = vunpack.c.l.b16 %v37
  %v128 = vunpack.c.h.b16 %v37
  %v129 = vunpack.c.l.b16 %v38
  %v130 = vunpack.c.h.b16 %v38
  %v131 = vunpack.c.l.b16 %v39
  %v132 = vunpack.c.h.b16 %v39
  %v133 = vunpack.c.l.b16 %v40
  %v134 = vunpack.c.h.b16 %v40
  %v135 = vunpack.c.l.b16 %v41
  %v136 = vunpack.c.h.b16 %v41
  %v137 = vunpack.c.l.b16 %v42
  %v138 = vunpack.c.h.b16 %v42
  %v139 = vunpack.c.l.b16 %v43
  %v140 = vunpack.c.h.b16 %v43
  %v141 = vunpack.c.l.b16 %v44
  %v142 = vunpack.c.h.b16 %v44
  %v143 = vunpack.c.l.b16 %v45
  %v144 = vunpack.c.h.b16 %v45
  %v145 = vunpack.c.l.b16 %v46
  %v146 = vunpack.c.h.b16 %v46
  %v147 = vunpack.c.l.b16 %v47
  %v148 = vunpack.c.h.b16 %v47
  %v149 = vunpack.c.l.b16 %v48
  %v150 = vunpack.c.h.b16 %v48
  %v151 = vpack.c.b16 %v121, %v119
  %v152 = vpack.c.b16 %v122, %v120
  %v153 = vpack.c.b16 %v125, %v123
  %v154 = vpack.c.b16 %v126, %v124
  %v155 = vpack.c.b16 %v129, %v127
  %v156 = vpack.c.b16 %v130, %v128
  %v157 = vpack.c.b16 %v133, %v131
  %v158 = vpack.c.b16 %v134, %v132
  %v159 = vpack.c.b16 %v137, %v135
  %v160 = vpack.c.b16 %v138, %v136
  %v161 = vpack.c.b16 %v141, %v139
  %v162 = vpack.c.b16 %v142, %v140
  %v163 = vpack.c.b16 %v145, %v143
  %v164 = vpack.c.b16 %v146, %v144
  %v165 = vpack.c.b16 %v149, %v147
  %v166 = vpack.c.b16 %v150, %v148
  %183 = vmatpush.bf16.msra.mxu0 %v165
  %184 = vmatpush.bf16.msra.mxu0 %v163
  %185 = vmatpush.bf16.msra.mxu0 %v161
  %186 = vmatpush.bf16.msra.mxu0 %v159
  %187 = vmatpush.bf16.msra.mxu0 %v157
  %188 = vmatpush.bf16.msra.mxu0 %v155
  %189 = vmatpush.bf16.msra.mxu0 %v153
  %190 = vmatpush.bf16.msra.mxu0 %v151
  %191 = vmatmul.bf16.gmra.mxu0 %v87
  %v192 = vpop.f32.mrf.mxu0
  %v193 = vadd.f32 %v51, %v192
  %v194 = vpop.f32.mrf.mxu0
  %v195 = vadd.f32 %v51, %v194
  %196 = vmatmul.bf16.gmra.mxu0 %v88
  %v197 = vpop.f32.mrf.mxu0
  %v198 = vadd.f32 %v51, %v197
  %v199 = vpop.f32.mrf.mxu0
  %v200 = vadd.f32 %v51, %v199
  %201 = vmatmul.bf16.gmra.mxu0 %v89
  %v202 = vpop.f32.mrf.mxu0
  %v203 = vadd.f32 %v51, %v202
  %v204 = vpop.f32.mrf.mxu0
  %v205 = vadd.f32 %v51, %v204
  %206 = vmatmul.bf16.gmra.mxu0 %v90
  %v207 = vpop.f32.mrf.mxu0
  %v208 = vadd.f32 %v51, %v207
  %v209 = vpop.f32.mrf.mxu0
  %v210 = vadd.f32 %v51, %v209
  %211 = vmatmul.bf16.gmra.mxu0 %v91
  %v212 = vpop.f32.mrf.mxu0
  %v213 = vadd.f32 %v51, %v212
  %v214 = vpop.f32.mrf.mxu0
  %v215 = vadd.f32 %v51, %v214
  %216 = vmatmul.bf16.gmra.mxu0 %v92
  %v217 = vpop.f32.mrf.mxu0
  %v218 = vadd.f32 %v51, %v217
  %v219 = vpop.f32.mrf.mxu0
  %v220 = vadd.f32 %v51, %v219
  %221 = vmatmul.bf16.gmra.mxu0 %v93
  %v222 = vpop.f32.mrf.mxu0
  %v223 = vadd.f32 %v51, %v222
  %v224 = vpop.f32.mrf.mxu0
  %v225 = vadd.f32 %v51, %v224
  %226 = vmatmul.bf16.gmra.mxu0 %v94
  %v227 = vpop.f32.mrf.mxu0
  %v228 = vadd.f32 %v51, %v227
  %v229 = vpop.f32.mrf.mxu0
  %v230 = vadd.f32 %v51, %v229
  %231 = vdwg.mxu0
  %232 = vmatpush.bf16.msra.mxu0 %v166
  %233 = vmatpush.bf16.msra.mxu0 %v164
  %234 = vmatpush.bf16.msra.mxu0 %v162
  %235 = vmatpush.bf16.msra.mxu0 %v160
  %236 = vmatpush.bf16.msra.mxu0 %v158
  %237 = vmatpush.bf16.msra.mxu0 %v156
  %238 = vmatpush.bf16.msra.mxu0 %v154
  %239 = vmatpush.bf16.msra.mxu0 %v152
  %240 = vmatmul.bf16.gmra.mxu0 %v87
  %v241 = vpop.f32.mrf.mxu0
  %v242 = vadd.f32 %v52, %v241
  %v243 = vpop.f32.mrf.mxu0
  %v244 = vadd.f32 %v52, %v243
  %245 = vmatmul.bf16.gmra.mxu0 %v88
  %v246 = vpop.f32.mrf.mxu0
  %v247 = vadd.f32 %v52, %v246
  %v248 = vpop.f32.mrf.mxu0
  %v249 = vadd.f32 %v52, %v248
  %250 = vmatmul.bf16.gmra.mxu0 %v89
  %v251 = vpop.f32.mrf.mxu0
  %v252 = vadd.f32 %v52, %v251
  %v253 = vpop.f32.mrf.mxu0
  %v254 = vadd.f32 %v52, %v253
  %255 = vmatmul.bf16.gmra.mxu0 %v90
  %v256 = vpop.f32.mrf.mxu0
  %v257 = vadd.f32 %v52, %v256
  %v258 = vpop.f32.mrf.mxu0
  %v259 = vadd.f32 %v52, %v258
  %260 = vmatmul.bf16.gmra.mxu0 %v91
  %v261 = vpop.f32.mrf.mxu0
  %v262 = vadd.f32 %v52, %v261
  %v263 = vpop.f32.mrf.mxu0
  %v264 = vadd.f32 %v52, %v263
  %265 = vmatmul.bf16.gmra.mxu0 %v92
  %v266 = vpop.f32.mrf.mxu0
  %v267 = vadd.f32 %v52, %v266
  %v268 = vpop.f32.mrf.mxu0
  %v269 = vadd.f32 %v52, %v268
  %270 = vmatmul.bf16.gmra.mxu0 %v93
  %v271 = vpop.f32.mrf.mxu0
  %v272 = vadd.f32 %v52, %v271
  %v273 = vpop.f32.mrf.mxu0
  %v274 = vadd.f32 %v52, %v273
  %275 = vmatmul.bf16.gmra.mxu0 %v94
  %v276 = vpop.f32.mrf.mxu0
  %v277 = vadd.f32 %v52, %v276
  %v278 = vpop.f32.mrf.mxu0
  %v279 = vadd.f32 %v52, %v278
  %280 = vdwg.mxu0
  %v281 = vld [vmem:[%s0] sm:$0xff]
  %v282 = vld [vmem:[%s0 + $0x8] sm:$0xff]
  %v283 = vld [vmem:[%s0 + $0x10] sm:$0xff]
  %v284 = vld [vmem:[%s0 + $0x18] sm:$0xff]
  %v285 = vld [vmem:[%s0 + $0x20] sm:$0xff]
  %v286 = vld [vmem:[%s0 + $0x28] sm:$0xff]
  %v287 = vld [vmem:[%s0 + $0x30] sm:$0xff]
  %v288 = vld [vmem:[%s0 + $0x38] sm:$0xff]
  %v289 = vld [vmem:[%s0 + $0x40] sm:$0xff]
  %v290 = vld [vmem:[%s0 + $0x48] sm:$0xff]
  %v291 = vld [vmem:[%s0 + $0x50] sm:$0xff]
  %v292 = vld [vmem:[%s0 + $0x58] sm:$0xff]
  %v293 = vld [vmem:[%s0 + $0x60] sm:$0xff]
  %v294 = vld [vmem:[%s0 + $0x68] sm:$0xff]
  %v295 = vld [vmem:[%s0 + $0x70] sm:$0xff]
  %v296 = vld [vmem:[%s0 + $0x78] sm:$0xff]
  %298 = vset.pattern.permute.xlu0 0
  %299 = vperm.xlu0 %298, %v281
  %v300 = vpop.permute.xlu0 %299
  %303 = vset.pattern.permute.xlu0 0
  %304 = vperm.xlu0 %303, %v282
  %v305 = vpop.permute.xlu0 %304
  %308 = vset.pattern.permute.xlu0 0
  %309 = vperm.xlu0 %308, %v283
  %v310 = vpop.permute.xlu0 %309
  %313 = vset.pattern.permute.xlu0 0
  %314 = vperm.xlu0 %313, %v284
  %v315 = vpop.permute.xlu0 %314
  %318 = vset.pattern.permute.xlu0 0
  %319 = vperm.xlu0 %318, %v285
  %v320 = vpop.permute.xlu0 %319
  %323 = vset.pattern.permute.xlu0 0
  %324 = vperm.xlu0 %323, %v286
  %v325 = vpop.permute.xlu0 %324
  %328 = vset.pattern.permute.xlu0 0
  %329 = vperm.xlu0 %328, %v287
  %v330 = vpop.permute.xlu0 %329
  %333 = vset.pattern.permute.xlu0 0
  %334 = vperm.xlu0 %333, %v288
  %v335 = vpop.permute.xlu0 %334
  %338 = vset.pattern.permute.xlu0 0
  %339 = vperm.xlu0 %338, %v289
  %v340 = vpop.permute.xlu0 %339
  %343 = vset.pattern.permute.xlu0 0
  %344 = vperm.xlu0 %343, %v290
  %v345 = vpop.permute.xlu0 %344
  %348 = vset.pattern.permute.xlu0 0
  %349 = vperm.xlu0 %348, %v291
  %v350 = vpop.permute.xlu0 %349
  %353 = vset.pattern.permute.xlu0 0
  %354 = vperm.xlu0 %353, %v292
  %v355 = vpop.permute.xlu0 %354
  %358 = vset.pattern.permute.xlu0 0
  %359 = vperm.xlu0 %358, %v293
  %v360 = vpop.permute.xlu0 %359
  %363 = vset.pattern.permute.xlu0 0
  %364 = vperm.xlu0 %363, %v294
  %v365 = vpop.permute.xlu0 %364
  %368 = vset.pattern.permute.xlu0 0
  %369 = vperm.xlu0 %368, %v295
  %v370 = vpop.permute.xlu0 %369
  %373 = vset.pattern.permute.xlu0 0
  %374 = vperm.xlu0 %373, %v296
  %v375 = vpop.permute.xlu0 %374
  %v377 = vmul.f32 %v300, %v193
  %v378 = vmul.f32 %v305, %v195
  %v379 = vmul.f32 %v310, %v198
  %v380 = vmul.f32 %v315, %v200
  %v381 = vmul.f32 %v320, %v203
  %v382 = vmul.f32 %v325, %v205
  %v383 = vmul.f32 %v330, %v208
  %v384 = vmul.f32 %v335, %v210
  %v385 = vmul.f32 %v340, %v213
  %v386 = vmul.f32 %v345, %v215
  %v387 = vmul.f32 %v350, %v218
  %v388 = vmul.f32 %v355, %v220
  %v389 = vmul.f32 %v360, %v223
  %v390 = vmul.f32 %v365, %v225
  %v391 = vmul.f32 %v370, %v228
  %v392 = vmul.f32 %v375, %v230
  %393 = vset.pattern.permute.xlu0 1
  %394 = vperm.xlu0 %393, %v281
  %v395 = vpop.permute.xlu0 %394
  %397 = vset.pattern.permute.xlu0 1
  %398 = vperm.xlu0 %397, %v282
  %v399 = vpop.permute.xlu0 %398
  %401 = vset.pattern.permute.xlu0 1
  %402 = vperm.xlu0 %401, %v283
  %v403 = vpop.permute.xlu0 %402
  %405 = vset.pattern.permute.xlu0 1
  %406 = vperm.xlu0 %405, %v284
  %v407 = vpop.permute.xlu0 %406
  %409 = vset.pattern.permute.xlu0 1
  %410 = vperm.xlu0 %409, %v285
  %v411 = vpop.permute.xlu0 %410
  %413 = vset.pattern.permute.xlu0 1
  %414 = vperm.xlu0 %413, %v286
  %v415 = vpop.permute.xlu0 %414
  %417 = vset.pattern.permute.xlu0 1
  %418 = vperm.xlu0 %417, %v287
  %v419 = vpop.permute.xlu0 %418
  %421 = vset.pattern.permute.xlu0 1
  %422 = vperm.xlu0 %421, %v288
  %v423 = vpop.permute.xlu0 %422
  %425 = vset.pattern.permute.xlu0 1
  %426 = vperm.xlu0 %425, %v289
  %v427 = vpop.permute.xlu0 %426
  %429 = vset.pattern.permute.xlu0 1
  %430 = vperm.xlu0 %429, %v290
  %v431 = vpop.permute.xlu0 %430
  %433 = vset.pattern.permute.xlu0 1
  %434 = vperm.xlu0 %433, %v291
  %v435 = vpop.permute.xlu0 %434
  %437 = vset.pattern.permute.xlu0 1
  %438 = vperm.xlu0 %437, %v292
  %v439 = vpop.permute.xlu0 %438
  %441 = vset.pattern.permute.xlu0 1
  %442 = vperm.xlu0 %441, %v293
  %v443 = vpop.permute.xlu0 %442
  %445 = vset.pattern.permute.xlu0 1
  %446 = vperm.xlu0 %445, %v294
  %v447 = vpop.permute.xlu0 %446
  %449 = vset.pattern.permute.xlu0 1
  %450 = vperm.xlu0 %449, %v295
  %v451 = vpop.permute.xlu0 %450
  %453 = vset.pattern.permute.xlu0 1
  %454 = vperm.xlu0 %453, %v296
  %v455 = vpop.permute.xlu0 %454
  %v457 = vmul.f32 %v395, %v242
  %v458 = vmul.f32 %v399, %v244
  %v459 = vmul.f32 %v403, %v247
  %v460 = vmul.f32 %v407, %v249
  %v461 = vmul.f32 %v411, %v252
  %v462 = vmul.f32 %v415, %v254
  %v463 = vmul.f32 %v419, %v257
  %v464 = vmul.f32 %v423, %v259
  %v465 = vmul.f32 %v427, %v262
  %v466 = vmul.f32 %v431, %v264
  %v467 = vmul.f32 %v435, %v267
  %v468 = vmul.f32 %v439, %v269
  %v469 = vmul.f32 %v443, %v272
  %v470 = vmul.f32 %v447, %v274
  %v471 = vmul.f32 %v451, %v277
  %v472 = vmul.f32 %v455, %v279
  %v473 = vadd.f32 %v377, %v457
  %v474 = vadd.f32 %v378, %v458
  %v475 = vadd.f32 %v379, %v459
  %v476 = vadd.f32 %v380, %v460
  %v477 = vadd.f32 %v381, %v461
  %v478 = vadd.f32 %v382, %v462
  %v479 = vadd.f32 %v383, %v463
  %v480 = vadd.f32 %v384, %v464
  %v481 = vadd.f32 %v385, %v465
  %v482 = vadd.f32 %v386, %v466
  %v483 = vadd.f32 %v387, %v467
  %v484 = vadd.f32 %v388, %v468
  %v485 = vadd.f32 %v389, %v469
  %v486 = vadd.f32 %v390, %v470
  %v487 = vadd.f32 %v391, %v471
  %v488 = vadd.f32 %v392, %v472
  %v489 = vmax.f32 %v473, 0.0
  %v490 = vmax.f32 %v474, 0.0
  %v491 = vmax.f32 %v475, 0.0
  %v492 = vmax.f32 %v476, 0.0
  %v493 = vmax.f32 %v477, 0.0
  %v494 = vmax.f32 %v478, 0.0
  %v495 = vmax.f32 %v479, 0.0
  %v496 = vmax.f32 %v480, 0.0
  %v497 = vmax.f32 %v481, 0.0
  %v498 = vmax.f32 %v482, 0.0
  %v499 = vmax.f32 %v483, 0.0
  %v500 = vmax.f32 %v484, 0.0
  %v501 = vmax.f32 %v485, 0.0
  %v502 = vmax.f32 %v486, 0.0
  %v503 = vmax.f32 %v487, 0.0
  %v504 = vmax.f32 %v488, 0.0
  %v505 = vpack.c.bf16 %v489, %v489
  %v506 = vpack.c.bf16 %v490, %v490
  %v507 = vpack.c.bf16 %v491, %v491
  %v508 = vpack.c.bf16 %v492, %v492
  %v509 = vpack.c.bf16 %v493, %v493
  %v510 = vpack.c.bf16 %v494, %v494
  %v511 = vpack.c.bf16 %v495, %v495
  %v512 = vpack.c.bf16 %v496, %v496
  %v513 = vpack.c.bf16 %v497, %v497
  %v514 = vpack.c.bf16 %v498, %v498
  %v515 = vpack.c.bf16 %v499, %v499
  %v516 = vpack.c.bf16 %v500, %v500
  %v517 = vpack.c.bf16 %v501, %v501
  %v518 = vpack.c.bf16 %v502, %v502
  %v519 = vpack.c.bf16 %v503, %v503
  %v520 = vpack.c.bf16 %v504, %v504
  %521 = vst [vmem:[%s4] sm:$0xf] %v505
  %522 = vst [vmem:[%s4 + $0x4] sm:$0xf] %v506
  %523 = vst [vmem:[%s4 + $0x8] sm:$0xf] %v507
  %524 = vst [vmem:[%s4 + $0xc] sm:$0xf] %v508
  %525 = vst [vmem:[%s4 + $0x10] sm:$0xf] %v509
  %526 = vst [vmem:[%s4 + $0x14] sm:$0xf] %v510
  %527 = vst [vmem:[%s4 + $0x18] sm:$0xf] %v511
  %528 = vst [vmem:[%s4 + $0x1c] sm:$0xf] %v512
  %529 = vst [vmem:[%s4 + $0x20] sm:$0xf] %v513
  %530 = vst [vmem:[%s4 + $0x24] sm:$0xf] %v514
  %531 = vst [vmem:[%s4 + $0x28] sm:$0xf] %v515
  %532 = vst [vmem:[%s4 + $0x2c] sm:$0xf] %v516
  %533 = vst [vmem:[%s4 + $0x30] sm:$0xf] %v517
  %534 = vst [vmem:[%s4 + $0x34] sm:$0xf] %v518
  %535 = vst [vmem:[%s4 + $0x38] sm:$0xf] %v519
  %536 = vst [vmem:[%s4 + $0x3c] sm:$0xf] %v520
  // Predicated region
  $region18: #{gnn_stack_forward.5} parent=0 // pred_check
    _
  $region19: #{gnn_stack_forward.5} parent=0 // pred_check_branch
    %538 = sbr.rel (0) target = $region21
  $region20: #{gnn_stack_forward.5} parent=0 // pred_region
    _
  $region21: #{gnn_stack_forward.5} parent=0 // pred_fallthru
    _
  // Predicated region
  $region22: #{gnn_stack_forward.5} parent=0 // pred_check
    _
  $region23: #{gnn_stack_forward.5} parent=0 // pred_check_branch
    %540 = sbr.rel (0) target = $region25
  $region24: #{gnn_stack_forward.5} parent=0 // pred_region
    _
  $region25: #{gnn_stack_forward.5} parent=0 // pred_fallthru
    _

// kernel: gnn_stack_forward.9
$region0: #{gnn_stack_forward.9}
  #allocation0 [shape = 'u32[]', space=smem, size = 0x4, offset = 0x4, fixed_abs, tag = 'smem constant byte address 0x4 - core index']
  #allocation1 [shape = 'u32[72,128]{1,0:T(1,128)}', space=vmem, size = 0x9000, scoped, tag = 'internal scratch']
  %s0 = inlined_call_operand.vmem [shape: bf16[128,128], index: 0, kind: input, shape index: {}]
  %s1 = inlined_call_operand.vmem [shape: bf16[128,128], index: 1, kind: input, shape index: {}]
  %s2 = inlined_call_operand.vmem [shape: f32[1,128], index: 2, kind: input, shape index: {}]
  %s3 = inlined_call_operand.vmem [shape: bf16[128,128], index: 3, kind: input, shape index: {}]
  %s4 = inlined_call_operand.vmem [shape: f32[1,128], index: 4, kind: input, shape index: {}]
  %s5 = inlined_call_operand.vmem [shape: f32[128,128], index: 5, kind: output, shape index: {}]
  %s6 = sld [smem:[#allocation0]]
  $region30: #{gnn_stack_forward.9} parent=0
    _
  %s8 = ssub.s32 1, %s6
  %s9 = scalar_select 0, %s8, %s6
  // Predicated region
  $region2: #{gnn_stack_forward.9} parent=0 // pred_check
    _
  $region3: #{gnn_stack_forward.9} parent=0 // pred_check_branch
    %11 = sbr.rel (0) target = $region5
  $region4: #{gnn_stack_forward.9} parent=0 // pred_region
    _
  $region5: #{gnn_stack_forward.9} parent=0 // pred_fallthru
    _
  // Predicated region
  $region6: #{gnn_stack_forward.9} parent=0 // pred_check
    _
  $region7: #{gnn_stack_forward.9} parent=0 // pred_check_branch
    %13 = sbr.rel (0) target = $region9
  $region8: #{gnn_stack_forward.9} parent=0 // pred_region
    _
  $region9: #{gnn_stack_forward.9} parent=0 // pred_fallthru
    _
  // Predicated region
  $region10: #{gnn_stack_forward.9} parent=0 // pred_check
    _
  $region11: #{gnn_stack_forward.9} parent=0 // pred_check_branch
    %15 = sbr.rel (0) target = $region13
  $region12: #{gnn_stack_forward.9} parent=0 // pred_region
    _
  $region13: #{gnn_stack_forward.9} parent=0 // pred_fallthru
    _
  // Predicated region
  $region14: #{gnn_stack_forward.9} parent=0 // pred_check
    _
  $region15: #{gnn_stack_forward.9} parent=0 // pred_check_branch
    %17 = sbr.rel (0) target = $region17
  $region16: #{gnn_stack_forward.9} parent=0 // pred_region
    _
  $region17: #{gnn_stack_forward.9} parent=0 // pred_fallthru
    _
  // Predicated region
  $region18: #{gnn_stack_forward.9} parent=0 // pred_check
    _
  $region19: #{gnn_stack_forward.9} parent=0 // pred_check_branch
    %19 = sbr.rel (0) target = $region21
  $region20: #{gnn_stack_forward.9} parent=0 // pred_region
    _
  $region21: #{gnn_stack_forward.9} parent=0 // pred_fallthru
    _
  %v20 = vld [vmem:[%s0] sm:$0xf]
  %v21 = vld [vmem:[%s0 + $0x4] sm:$0xf]
  %v22 = vld [vmem:[%s0 + $0x8] sm:$0xf]
  %v23 = vld [vmem:[%s0 + $0xc] sm:$0xf]
  %v24 = vld [vmem:[%s0 + $0x10] sm:$0xf]
  %v25 = vld [vmem:[%s0 + $0x14] sm:$0xf]
  %v26 = vld [vmem:[%s0 + $0x18] sm:$0xf]
  %v27 = vld [vmem:[%s0 + $0x1c] sm:$0xf]
  %v28 = vld [vmem:[%s0 + $0x20] sm:$0xf]
  %v29 = vld [vmem:[%s0 + $0x24] sm:$0xf]
  %v30 = vld [vmem:[%s0 + $0x28] sm:$0xf]
  %v31 = vld [vmem:[%s0 + $0x2c] sm:$0xf]
  %v32 = vld [vmem:[%s0 + $0x30] sm:$0xf]
  %v33 = vld [vmem:[%s0 + $0x34] sm:$0xf]
  %v34 = vld [vmem:[%s0 + $0x38] sm:$0xf]
  %v35 = vld [vmem:[%s0 + $0x3c] sm:$0xf]
  %v36 = vld [vmem:[%s1] sm:$0xf]
  %v37 = vld [vmem:[%s1 + $0x4] sm:$0xf]
  %v38 = vld [vmem:[%s1 + $0x8] sm:$0xf]
  %v39 = vld [vmem:[%s1 + $0xc] sm:$0xf]
  %v40 = vld [vmem:[%s1 + $0x10] sm:$0xf]
  %v41 = vld [vmem:[%s1 + $0x14] sm:$0xf]
  %v42 = vld [vmem:[%s1 + $0x18] sm:$0xf]
  %v43 = vld [vmem:[%s1 + $0x1c] sm:$0xf]
  %v44 = vld [vmem:[%s1 + $0x20] sm:$0xf]
  %v45 = vld [vmem:[%s1 + $0x24] sm:$0xf]
  %v46 = vld [vmem:[%s1 + $0x28] sm:$0xf]
  %v47 = vld [vmem:[%s1 + $0x2c] sm:$0xf]
  %v48 = vld [vmem:[%s1 + $0x30] sm:$0xf]
  %v49 = vld [vmem:[%s1 + $0x34] sm:$0xf]
  %v50 = vld [vmem:[%s1 + $0x38] sm:$0xf]
  %v51 = vld [vmem:[%s1 + $0x3c] sm:$0xf]
  %v52 = vld [vmem:[%s2] sm:$0x1]
  %v54 = vperm.slane %v52, 0
  %v72 = vunpack.c.l.b16 %v20
  %v73 = vunpack.c.l.b16 %v21
  %v74 = vunpack.c.l.b16 %v22
  %v75 = vunpack.c.l.b16 %v23
  %v76 = vunpack.c.l.b16 %v24
  %v77 = vunpack.c.l.b16 %v25
  %v78 = vunpack.c.l.b16 %v26
  %v79 = vunpack.c.l.b16 %v27
  %v80 = vunpack.c.l.b16 %v28
  %v81 = vunpack.c.l.b16 %v29
  %v82 = vunpack.c.l.b16 %v30
  %v83 = vunpack.c.l.b16 %v31
  %v84 = vunpack.c.l.b16 %v32
  %v85 = vunpack.c.l.b16 %v33
  %v86 = vunpack.c.l.b16 %v34
  %v87 = vunpack.c.l.b16 %v35
  %v88 = vpack.c.b16 %v73, %v72
  %v89 = vpack.c.b16 %v75, %v74
  %v90 = vpack.c.b16 %v77, %v76
  %v91 = vpack.c.b16 %v79, %v78
  %v92 = vpack.c.b16 %v81, %v80
  %v93 = vpack.c.b16 %v83, %v82
  %v94 = vpack.c.b16 %v85, %v84
  %v95 = vpack.c.b16 %v87, %v86
  %v120 = vunpack.c.l.b16 %v36
  %v121 = vunpack.c.l.b16 %v37
  %v122 = vunpack.c.l.b16 %v38
  %v123 = vunpack.c.l.b16 %v39
  %v124 = vunpack.c.l.b16 %v40
  %v125 = vunpack.c.l.b16 %v41
  %v126 = vunpack.c.l.b16 %v42
  %v127 = vunpack.c.l.b16 %v43
  %v128 = vunpack.c.l.b16 %v44
  %v129 = vunpack.c.l.b16 %v45
  %v130 = vunpack.c.l.b16 %v46
  %v131 = vunpack.c.l.b16 %v47
  %v132 = vunpack.c.l.b16 %v48
  %v133 = vunpack.c.l.b16 %v49
  %v134 = vunpack.c.l.b16 %v50
  %v135 = vunpack.c.l.b16 %v51
  %v136 = vpack.c.b16 %v121, %v120
  %v137 = vpack.c.b16 %v123, %v122
  %v138 = vpack.c.b16 %v125, %v124
  %v139 = vpack.c.b16 %v127, %v126
  %v140 = vpack.c.b16 %v129, %v128
  %v141 = vpack.c.b16 %v131, %v130
  %v142 = vpack.c.b16 %v133, %v132
  %v143 = vpack.c.b16 %v135, %v134
  %152 = vmatpush.bf16.msra.mxu0 %v143
  %153 = vmatpush.bf16.msra.mxu0 %v142
  %154 = vmatpush.bf16.msra.mxu0 %v141
  %155 = vmatpush.bf16.msra.mxu0 %v140
  %156 = vmatpush.bf16.msra.mxu0 %v139
  %157 = vmatpush.bf16.msra.mxu0 %v138
  %158 = vmatpush.bf16.msra.mxu0 %v137
  %159 = vmatpush.bf16.msra.mxu0 %v136
  %160 = vmatmul.bf16.gmra.mxu0 %v88
  %v161 = vpop.f32.mrf.mxu0
  %v162 = vadd.f32 %v54, %v161
  %v163 = vpop.f32.mrf.mxu0
  %v164 = vadd.f32 %v54, %v163
  %165 = vmatmul.bf16.gmra.mxu0 %v89
  %v166 = vpop.f32.mrf.mxu0
  %v167 = vadd.f32 %v54, %v166
  %v168 = vpop.f32.mrf.mxu0
  %v169 = vadd.f32 %v54, %v168
  %170 = vmatmul.bf16.gmra.mxu0 %v90
  %v171 = vpop.f32.mrf.mxu0
  %v172 = vadd.f32 %v54, %v171
  %v173 = vpop.f32.mrf.mxu0
  %v174 = vadd.f32 %v54, %v173
  %175 = vmatmul.bf16.gmra.mxu0 %v91
  %v176 = vpop.f32.mrf.mxu0
  %v177 = vadd.f32 %v54, %v176
  %v178 = vpop.f32.mrf.mxu0
  %v179 = vadd.f32 %v54, %v178
  %180 = vmatmul.bf16.gmra.mxu0 %v92
  %v181 = vpop.f32.mrf.mxu0
  %v182 = vadd.f32 %v54, %v181
  %v183 = vpop.f32.mrf.mxu0
  %v184 = vadd.f32 %v54, %v183
  %185 = vmatmul.bf16.gmra.mxu0 %v93
  %v186 = vpop.f32.mrf.mxu0
  %v187 = vadd.f32 %v54, %v186
  %v188 = vpop.f32.mrf.mxu0
  %v189 = vadd.f32 %v54, %v188
  %190 = vmatmul.bf16.gmra.mxu0 %v94
  %v191 = vpop.f32.mrf.mxu0
  %v192 = vadd.f32 %v54, %v191
  %v193 = vpop.f32.mrf.mxu0
  %v194 = vadd.f32 %v54, %v193
  %195 = vmatmul.bf16.gmra.mxu0 %v95
  %v196 = vpop.f32.mrf.mxu0
  %v197 = vadd.f32 %v54, %v196
  %v198 = vpop.f32.mrf.mxu0
  %v199 = vadd.f32 %v54, %v198
  %200 = vdwg.mxu0
  %v201 = vpack.c.bf16 %v164, %v162
  %v202 = vpack.c.bf16 %v169, %v167
  %v203 = vpack.c.bf16 %v174, %v172
  %v204 = vpack.c.bf16 %v179, %v177
  %v205 = vpack.c.bf16 %v184, %v182
  %v206 = vpack.c.bf16 %v189, %v187
  %v207 = vpack.c.bf16 %v194, %v192
  %v208 = vpack.c.bf16 %v199, %v197
  %v209 = vld [vmem:[%s3] sm:$0xf]
  %v210 = vld [vmem:[%s3 + $0x4] sm:$0xf]
  %v211 = vld [vmem:[%s3 + $0x8] sm:$0xf]
  %v212 = vld [vmem:[%s3 + $0xc] sm:$0xf]
  %v213 = vld [vmem:[%s3 + $0x10] sm:$0xf]
  %v214 = vld [vmem:[%s3 + $0x14] sm:$0xf]
  %v215 = vld [vmem:[%s3 + $0x18] sm:$0xf]
  %v216 = vld [vmem:[%s3 + $0x1c] sm:$0xf]
  %v217 = vld [vmem:[%s3 + $0x20] sm:$0xf]
  %v218 = vld [vmem:[%s3 + $0x24] sm:$0xf]
  %v219 = vld [vmem:[%s3 + $0x28] sm:$0xf]
  %v220 = vld [vmem:[%s3 + $0x2c] sm:$0xf]
  %v221 = vld [vmem:[%s3 + $0x30] sm:$0xf]
  %v222 = vld [vmem:[%s3 + $0x34] sm:$0xf]
  %v223 = vld [vmem:[%s3 + $0x38] sm:$0xf]
  %v224 = vld [vmem:[%s3 + $0x3c] sm:$0xf]
  %v225 = vld [vmem:[%s4] sm:$0x1]
  %v227 = vperm.slane %v225, 0
  %v245 = vunpack.c.l.b16 %v209
  %v246 = vunpack.c.l.b16 %v210
  %v247 = vunpack.c.l.b16 %v211
  %v248 = vunpack.c.l.b16 %v212
  %v249 = vunpack.c.l.b16 %v213
  %v250 = vunpack.c.l.b16 %v214
  %v251 = vunpack.c.l.b16 %v215
  %v252 = vunpack.c.l.b16 %v216
  %v253 = vunpack.c.l.b16 %v217
  %v254 = vunpack.c.l.b16 %v218
  %v255 = vunpack.c.l.b16 %v219
  %v256 = vunpack.c.l.b16 %v220
  %v257 = vunpack.c.l.b16 %v221
  %v258 = vunpack.c.l.b16 %v222
  %v259 = vunpack.c.l.b16 %v223
  %v260 = vunpack.c.l.b16 %v224
  %v261 = vpack.c.b16 %v246, %v245
  %v262 = vpack.c.b16 %v248, %v247
  %v263 = vpack.c.b16 %v250, %v249
  %v264 = vpack.c.b16 %v252, %v251
  %v265 = vpack.c.b16 %v254, %v253
  %v266 = vpack.c.b16 %v256, %v255
  %v267 = vpack.c.b16 %v258, %v257
  %v268 = vpack.c.b16 %v260, %v259
  %277 = vmatpush.bf16.msra.mxu0 %v268
  %278 = vmatpush.bf16.msra.mxu0 %v267
  %279 = vmatpush.bf16.msra.mxu0 %v266
  %280 = vmatpush.bf16.msra.mxu0 %v265
  %281 = vmatpush.bf16.msra.mxu0 %v264
  %282 = vmatpush.bf16.msra.mxu0 %v263
  %283 = vmatpush.bf16.msra.mxu0 %v262
  %284 = vmatpush.bf16.msra.mxu0 %v261
  %285 = vmatmul.bf16.gmra.mxu0 %v201
  %v286 = vpop.f32.mrf.mxu0
  %v287 = vadd.f32 %v227, %v286
  %v288 = vpop.f32.mrf.mxu0
  %v289 = vadd.f32 %v227, %v288
  %290 = vmatmul.bf16.gmra.mxu0 %v202
  %v291 = vpop.f32.mrf.mxu0
  %v292 = vadd.f32 %v227, %v291
  %v293 = vpop.f32.mrf.mxu0
  %v294 = vadd.f32 %v227, %v293
  %295 = vmatmul.bf16.gmra.mxu0 %v203
  %v296 = vpop.f32.mrf.mxu0
  %v297 = vadd.f32 %v227, %v296
  %v298 = vpop.f32.mrf.mxu0
  %v299 = vadd.f32 %v227, %v298
  %300 = vmatmul.bf16.gmra.mxu0 %v204
  %v301 = vpop.f32.mrf.mxu0
  %v302 = vadd.f32 %v227, %v301
  %v303 = vpop.f32.mrf.mxu0
  %v304 = vadd.f32 %v227, %v303
  %305 = vmatmul.bf16.gmra.mxu0 %v205
  %v306 = vpop.f32.mrf.mxu0
  %v307 = vadd.f32 %v227, %v306
  %v308 = vpop.f32.mrf.mxu0
  %v309 = vadd.f32 %v227, %v308
  %310 = vmatmul.bf16.gmra.mxu0 %v206
  %v311 = vpop.f32.mrf.mxu0
  %v312 = vadd.f32 %v227, %v311
  %v313 = vpop.f32.mrf.mxu0
  %v314 = vadd.f32 %v227, %v313
  %315 = vmatmul.bf16.gmra.mxu0 %v207
  %v316 = vpop.f32.mrf.mxu0
  %v317 = vadd.f32 %v227, %v316
  %v318 = vpop.f32.mrf.mxu0
  %v319 = vadd.f32 %v227, %v318
  %320 = vmatmul.bf16.gmra.mxu0 %v208
  %v321 = vpop.f32.mrf.mxu0
  %v322 = vadd.f32 %v227, %v321
  %v323 = vpop.f32.mrf.mxu0
  %v324 = vadd.f32 %v227, %v323
  %325 = vdwg.mxu0
  %326 = vmax.xlane.f32.xlu0 %v287
  %v327 = vpop.xlane.xlu0 %326
  %328 = vmax.xlane.f32.xlu0 %v289
  %v329 = vpop.xlane.xlu0 %328
  %330 = vmax.xlane.f32.xlu0 %v292
  %v331 = vpop.xlane.xlu0 %330
  %332 = vmax.xlane.f32.xlu0 %v294
  %v333 = vpop.xlane.xlu0 %332
  %334 = vmax.xlane.f32.xlu0 %v297
  %v335 = vpop.xlane.xlu0 %334
  %336 = vmax.xlane.f32.xlu0 %v299
  %v337 = vpop.xlane.xlu0 %336
  %338 = vmax.xlane.f32.xlu0 %v302
  %v339 = vpop.xlane.xlu0 %338
  %340 = vmax.xlane.f32.xlu0 %v304
  %v341 = vpop.xlane.xlu0 %340
  %342 = vmax.xlane.f32.xlu0 %v307
  %v343 = vpop.xlane.xlu0 %342
  %344 = vmax.xlane.f32.xlu0 %v309
  %v345 = vpop.xlane.xlu0 %344
  %346 = vmax.xlane.f32.xlu0 %v312
  %v347 = vpop.xlane.xlu0 %346
  %348 = vmax.xlane.f32.xlu0 %v314
  %v349 = vpop.xlane.xlu0 %348
  %350 = vmax.xlane.f32.xlu0 %v317
  %v351 = vpop.xlane.xlu0 %350
  %352 = vmax.xlane.f32.xlu0 %v319
  %v353 = vpop.xlane.xlu0 %352
  %354 = vmax.xlane.f32.xlu0 %v322
  %v355 = vpop.xlane.xlu0 %354
  %356 = vmax.xlane.f32.xlu0 %v324
  %v357 = vpop.xlane.xlu0 %356
  %v358 = vsub.f32 %v287, %v327
  %v359 = vsub.f32 %v289, %v329
  %v360 = vsub.f32 %v292, %v331
  %v361 = vsub.f32 %v294, %v333
  %v362 = vsub.f32 %v297, %v335
  %v363 = vsub.f32 %v299, %v337
  %v364 = vsub.f32 %v302, %v339
  %v365 = vsub.f32 %v304, %v341
  %v366 = vsub.f32 %v307, %v343
  %v367 = vsub.f32 %v309, %v345
  %v368 = vsub.f32 %v312, %v347
  %v369 = vsub.f32 %v314, %v349
  %v370 = vsub.f32 %v317, %v351
  %v371 = vsub.f32 %v319, %v353
  %v372 = vsub.f32 %v322, %v355
  %v373 = vsub.f32 %v324, %v357
  %v374 = vmul.f32 %v358, 1.442695
  %v375 = vpow.pop %v374
  %v376 = vmul.f32 %v359, 1.442695
  %v377 = vpow.pop %v376
  %v378 = vmul.f32 %v360, 1.442695
  %v379 = vpow.pop %v378
  %v380 = vmul.f32 %v361, 1.442695
  %v381 = vpow.pop %v380
  %v382 = vmul.f32 %v362, 1.442695
  %v383 = vpow.pop %v382
  %v384 = vmul.f32 %v363, 1.442695
  %v385 = vpow.pop %v384
  %v386 = vmul.f32 %v364, 1.442695
  %v387 = vpow.pop %v386
  %v388 = vmul.f32 %v365, 1.442695
  %v389 = vpow.pop %v388
  %v390 = vmul.f32 %v366, 1.442695
  %v391 = vpow.pop %v390
  %v392 = vmul.f32 %v367, 1.442695
  %v393 = vpow.pop %v392
  %v394 = vmul.f32 %v368, 1.442695
  %v395 = vpow.pop %v394
  %v396 = vmul.f32 %v369, 1.442695
  %v397 = vpow.pop %v396
  %v398 = vmul.f32 %v370, 1.442695
  %v399 = vpow.pop %v398
  %v400 = vmul.f32 %v371, 1.442695
  %v401 = vpow.pop %v400
  %v402 = vmul.f32 %v372, 1.442695
  %v403 = vpow.pop %v402
  %v404 = vmul.f32 %v373, 1.442695
  %v405 = vpow.pop %v404
  %406 = vadd.xlane.f32.xlu0 %v375
  %v407 = vpop.xlane.xlu0 %406
  %408 = vadd.xlane.f32.xlu0 %v377
  %v409 = vpop.xlane.xlu0 %408
  %410 = vadd.xlane.f32.xlu0 %v379
  %v411 = vpop.xlane.xlu0 %410
  %412 = vadd.xlane.f32.xlu0 %v381
  %v413 = vpop.xlane.xlu0 %412
  %414 = vadd.xlane.f32.xlu0 %v383
  %v415 = vpop.xlane.xlu0 %414
  %416 = vadd.xlane.f32.xlu0 %v385
  %v417 = vpop.xlane.xlu0 %416
  %418 = vadd.xlane.f32.xlu0 %v387
  %v419 = vpop.xlane.xlu0 %418
  %420 = vadd.xlane.f32.xlu0 %v389
  %v421 = vpop.xlane.xlu0 %420
  %422 = vadd.xlane.f32.xlu0 %v391
  %v423 = vpop.xlane.xlu0 %422
  %424 = vadd.xlane.f32.xlu0 %v393
  %v425 = vpop.xlane.xlu0 %424
  %426 = vadd.xlane.f32.xlu0 %v395
  %v427 = vpop.xlane.xlu0 %426
  %428 = vadd.xlane.f32.xlu0 %v397
  %v429 = vpop.xlane.xlu0 %428
  %430 = vadd.xlane.f32.xlu0 %v399
  %v431 = vpop.xlane.xlu0 %430
  %432 = vadd.xlane.f32.xlu0 %v401
  %v433 = vpop.xlane.xlu0 %432
  %434 = vadd.xlane.f32.xlu0 %v403
  %v435 = vpop.xlane.xlu0 %434
  %436 = vadd.xlane.f32.xlu0 %v405
  %v437 = vpop.xlane.xlu0 %436
  %v438 = vlog2.pop %v407
  %v439 = vmul.f32 %v438, 0.6931472
  %v440 = vlog2.pop %v409
  %v441 = vmul.f32 %v440, 0.6931472
  %v442 = vlog2.pop %v411
  %v443 = vmul.f32 %v442, 0.6931472
  %v444 = vlog2.pop %v413
  %v445 = vmul.f32 %v444, 0.6931472
  %v446 = vlog2.pop %v415
  %v447 = vmul.f32 %v446, 0.6931472
  %v448 = vlog2.pop %v417
  %v449 = vmul.f32 %v448, 0.6931472
  %v450 = vlog2.pop %v419
  %v451 = vmul.f32 %v450, 0.6931472
  %v452 = vlog2.pop %v421
  %v453 = vmul.f32 %v452, 0.6931472
  %v454 = vlog2.pop %v423
  %v455 = vmul.f32 %v454, 0.6931472
  %v456 = vlog2.pop %v425
  %v457 = vmul.f32 %v456, 0.6931472
  %v458 = vlog2.pop %v427
  %v459 = vmul.f32 %v458, 0.6931472
  %v460 = vlog2.pop %v429
  %v461 = vmul.f32 %v460, 0.6931472
  %v462 = vlog2.pop %v431
  %v463 = vmul.f32 %v462, 0.6931472
  %v464 = vlog2.pop %v433
  %v465 = vmul.f32 %v464, 0.6931472
  %v466 = vlog2.pop %v435
  %v467 = vmul.f32 %v466, 0.6931472
  %v468 = vlog2.pop %v437
  %v469 = vmul.f32 %v468, 0.6931472
  %v470 = vsub.f32 %v358, %v439
  %v471 = vsub.f32 %v359, %v441
  %v472 = vsub.f32 %v360, %v443
  %v473 = vsub.f32 %v361, %v445
  %v474 = vsub.f32 %v362, %v447
  %v475 = vsub.f32 %v363, %v449
  %v476 = vsub.f32 %v364, %v451
  %v477 = vsub.f32 %v365, %v453
  %v478 = vsub.f32 %v366, %v455
  %v479 = vsub.f32 %v367, %v457
  %v480 = vsub.f32 %v368, %v459
  %v481 = vsub.f32 %v369, %v461
  %v482 = vsub.f32 %v370, %v463
  %v483 = vsub.f32 %v371, %v465
  %v484 = vsub.f32 %v372, %v467
  %v485 = vsub.f32 %v373, %v469
  %486 = vst [vmem:[%s5] sm:$0xff] %v470
  %487 = vst [vmem:[%s5 + $0x8] sm:$0xff] %v471
  %488 = vst [vmem:[%s5 + $0x10] sm:$0xff] %v472
  %489 = vst [vmem:[%s5 + $0x18] sm:$0xff] %v473
  %490 = vst [vmem:[%s5 + $0x20] sm:$0xff] %v474
  %491 = vst [vmem:[%s5 + $0x28] sm:$0xff] %v475
  %492 = vst [vmem:[%s5 + $0x30] sm:$0xff] %v476
  %493 = vst [vmem:[%s5 + $0x38] sm:$0xff] %v477
  %494 = vst [vmem:[%s5 + $0x40] sm:$0xff] %v478
  %495 = vst [vmem:[%s5 + $0x48] sm:$0xff] %v479
  %496 = vst [vmem:[%s5 + $0x50] sm:$0xff] %v480
  %497 = vst [vmem:[%s5 + $0x58] sm:$0xff] %v481
  %498 = vst [vmem:[%s5 + $0x60] sm:$0xff] %v482
  %499 = vst [vmem:[%s5 + $0x68] sm:$0xff] %v483
  %500 = vst [vmem:[%s5 + $0x70] sm:$0xff] %v484
  %501 = vst [vmem:[%s5 + $0x78] sm:$0xff] %v485
  // Predicated region
  $region22: #{gnn_stack_forward.9} parent=0 // pred_check
    _
  $region23: #{gnn_stack_forward.9} parent=0 // pred_check_branch
    %503 = sbr.rel (0) target = $region25
  $region24: #{gnn_stack_forward.9} parent=0 // pred_region
    _
  $region25: #{gnn_stack_forward.9} parent=0 // pred_fallthru
    _
  // Predicated region
  $region26: #{gnn_stack_forward.9} parent=0 // pred_check
    _
  $region27: #{gnn_stack_forward.9} parent=0 // pred_check_branch
    %505 = sbr.rel (0) target = $region29
  $region28: #{gnn_stack_forward.9} parent=0 // pred_region
    _
  $region29: #{gnn_stack_forward.9} parent=0 // pred_fallthru
    _

// kernel: gnn_stack_forward.6
$region0: #{gnn_stack_forward.6}
  #allocation0 [shape = 'u32[]', space=smem, size = 0x4, offset = 0x4, fixed_abs, tag = 'smem constant byte address 0x4 - core index']
  #allocation1 [shape = 'u32[72,128]{1,0:T(1,128)}', space=vmem, size = 0x9000, scoped, tag = 'internal scratch']
  #allocation2 [shape = 'f32[128,128]{1,0:T(8,128)}', space=vmem, size = 0x10000, scoped, tag = 'scratch operand']
  %s0 = inlined_call_operand.vmem [shape: f32[128,2], index: 0, kind: input, shape index: {}]
  %s1 = inlined_call_operand.vmem [shape: bf16[128,128], index: 1, kind: input, shape index: {}]
  %s2 = inlined_call_operand.vmem [shape: f32[128,1], index: 2, kind: input, shape index: {}]
  %s3 = inlined_call_operand.vmem [shape: bf16[128,128], index: 3, kind: input, shape index: {}]
  %s4 = inlined_call_operand.vmem [shape: bf16[128,128], index: 4, kind: input, shape index: {}]
  %s5 = inlined_call_operand.vmem [shape: bf16[128,256], index: 5, kind: input, shape index: {}]
  %s6 = inlined_call_operand.vmem [shape: bf16[128,256], index: 6, kind: input, shape index: {}]
  %s7 = inlined_call_operand.vmem [shape: f32[1,256], index: 7, kind: input, shape index: {}]
  %s8 = inlined_call_operand.vmem [shape: bf16[128,128], index: 8, kind: output, shape index: {}]
  %s9 = sld [smem:[#allocation0]]
  $region50: #{gnn_stack_forward.6} parent=0
    _
  %s11 = ssub.s32 1, %s9
  %s12 = scalar_select 0, %s11, %s9
  // Predicated region
  $region2: #{gnn_stack_forward.6} parent=0 // pred_check
    _
  $region3: #{gnn_stack_forward.6} parent=0 // pred_check_branch
    %14 = sbr.rel (0) target = $region5
  $region4: #{gnn_stack_forward.6} parent=0 // pred_region
    _
  $region5: #{gnn_stack_forward.6} parent=0 // pred_fallthru
    _
  // Predicated region
  $region6: #{gnn_stack_forward.6} parent=0 // pred_check
    _
  $region7: #{gnn_stack_forward.6} parent=0 // pred_check_branch
    %16 = sbr.rel (0) target = $region9
  $region8: #{gnn_stack_forward.6} parent=0 // pred_region
    _
  $region9: #{gnn_stack_forward.6} parent=0 // pred_fallthru
    _
  // Predicated region
  $region10: #{gnn_stack_forward.6} parent=0 // pred_check
    _
  $region11: #{gnn_stack_forward.6} parent=0 // pred_check_branch
    %18 = sbr.rel (0) target = $region13
  $region12: #{gnn_stack_forward.6} parent=0 // pred_region
    _
  $region13: #{gnn_stack_forward.6} parent=0 // pred_fallthru
    _
  // Predicated region
  $region14: #{gnn_stack_forward.6} parent=0 // pred_check
    _
  $region15: #{gnn_stack_forward.6} parent=0 // pred_check_branch
    %20 = sbr.rel (0) target = $region17
  $region16: #{gnn_stack_forward.6} parent=0 // pred_region
    _
  $region17: #{gnn_stack_forward.6} parent=0 // pred_fallthru
    _
  // Predicated region
  $region18: #{gnn_stack_forward.6} parent=0 // pred_check
    _
  $region19: #{gnn_stack_forward.6} parent=0 // pred_check_branch
    %22 = sbr.rel (0) target = $region21
  $region20: #{gnn_stack_forward.6} parent=0 // pred_region
    _
  $region21: #{gnn_stack_forward.6} parent=0 // pred_fallthru
    _
  // Predicated region
  $region22: #{gnn_stack_forward.6} parent=0 // pred_check
    _
  $region23: #{gnn_stack_forward.6} parent=0 // pred_check_branch
    %24 = sbr.rel (0) target = $region25
  $region24: #{gnn_stack_forward.6} parent=0 // pred_region
    _
  $region25: #{gnn_stack_forward.6} parent=0 // pred_fallthru
    _
  // Predicated region
  $region26: #{gnn_stack_forward.6} parent=0 // pred_check
    _
  $region27: #{gnn_stack_forward.6} parent=0 // pred_check_branch
    %26 = sbr.rel (0) target = $region29
  $region28: #{gnn_stack_forward.6} parent=0 // pred_region
    _
  $region29: #{gnn_stack_forward.6} parent=0 // pred_fallthru
    _
  // Predicated region
  $region30: #{gnn_stack_forward.6} parent=0 // pred_check
    _
  $region31: #{gnn_stack_forward.6} parent=0 // pred_check_branch
    %28 = sbr.rel (0) target = $region33
  $region32: #{gnn_stack_forward.6} parent=0 // pred_region
    _
  $region33: #{gnn_stack_forward.6} parent=0 // pred_fallthru
    _
  %p29 = scmp.eq.s32.totalorder 0, 0
  // Predicated region
  $region34: #{gnn_stack_forward.6} parent=0 // pred_check
    %p30 = pneg %p29
  $region35: #{gnn_stack_forward.6} parent=0 // pred_check_branch
    %32 = sbr.rel (%p30) target = $region37
  $region36: #{gnn_stack_forward.6} parent=0 // pred_region
    %33 = vst [vmem:[#allocation2] sm:$0xff] 0.0
    %34 = vst [vmem:[#allocation2 + $0x8] sm:$0xff] 0.0
    %35 = vst [vmem:[#allocation2 + $0x10] sm:$0xff] 0.0
    %36 = vst [vmem:[#allocation2 + $0x18] sm:$0xff] 0.0
    %37 = vst [vmem:[#allocation2 + $0x20] sm:$0xff] 0.0
    %38 = vst [vmem:[#allocation2 + $0x28] sm:$0xff] 0.0
    %39 = vst [vmem:[#allocation2 + $0x30] sm:$0xff] 0.0
    %40 = vst [vmem:[#allocation2 + $0x38] sm:$0xff] 0.0
    %41 = vst [vmem:[#allocation2 + $0x40] sm:$0xff] 0.0
    %42 = vst [vmem:[#allocation2 + $0x48] sm:$0xff] 0.0
    %43 = vst [vmem:[#allocation2 + $0x50] sm:$0xff] 0.0
    %44 = vst [vmem:[#allocation2 + $0x58] sm:$0xff] 0.0
    %45 = vst [vmem:[#allocation2 + $0x60] sm:$0xff] 0.0
    %46 = vst [vmem:[#allocation2 + $0x68] sm:$0xff] 0.0
    %47 = vst [vmem:[#allocation2 + $0x70] sm:$0xff] 0.0
    %48 = vst [vmem:[#allocation2 + $0x78] sm:$0xff] 0.0
  $region37: #{gnn_stack_forward.6} parent=0 // pred_fallthru
    _
  %v49 = vld [vmem:[#allocation2] sm:$0xff]
  %v50 = vld [vmem:[#allocation2 + $0x8] sm:$0xff]
  %v51 = vld [vmem:[#allocation2 + $0x10] sm:$0xff]
  %v52 = vld [vmem:[#allocation2 + $0x18] sm:$0xff]
  %v53 = vld [vmem:[#allocation2 + $0x20] sm:$0xff]
  %v54 = vld [vmem:[#allocation2 + $0x28] sm:$0xff]
  %v55 = vld [vmem:[#allocation2 + $0x30] sm:$0xff]
  %v56 = vld [vmem:[#allocation2 + $0x38] sm:$0xff]
  %v57 = vld [vmem:[#allocation2 + $0x40] sm:$0xff]
  %v58 = vld [vmem:[#allocation2 + $0x48] sm:$0xff]
  %v59 = vld [vmem:[#allocation2 + $0x50] sm:$0xff]
  %v60 = vld [vmem:[#allocation2 + $0x58] sm:$0xff]
  %v61 = vld [vmem:[#allocation2 + $0x60] sm:$0xff]
  %v62 = vld [vmem:[#allocation2 + $0x68] sm:$0xff]
  %v63 = vld [vmem:[#allocation2 + $0x70] sm:$0xff]
  %v64 = vld [vmem:[#allocation2 + $0x78] sm:$0xff]
  %v65 = vld [vmem:[%s3] sm:$0xf]
  %v66 = vld [vmem:[%s3 + $0x4] sm:$0xf]
  %v67 = vld [vmem:[%s3 + $0x8] sm:$0xf]
  %v68 = vld [vmem:[%s3 + $0xc] sm:$0xf]
  %v69 = vld [vmem:[%s3 + $0x10] sm:$0xf]
  %v70 = vld [vmem:[%s3 + $0x14] sm:$0xf]
  %v71 = vld [vmem:[%s3 + $0x18] sm:$0xf]
  %v72 = vld [vmem:[%s3 + $0x1c] sm:$0xf]
  %v73 = vld [vmem:[%s3 + $0x20] sm:$0xf]
  %v74 = vld [vmem:[%s3 + $0x24] sm:$0xf]
  %v75 = vld [vmem:[%s3 + $0x28] sm:$0xf]
  %v76 = vld [vmem:[%s3 + $0x2c] sm:$0xf]
  %v77 = vld [vmem:[%s3 + $0x30] sm:$0xf]
  %v78 = vld [vmem:[%s3 + $0x34] sm:$0xf]
  %v79 = vld [vmem:[%s3 + $0x38] sm:$0xf]
  %v80 = vld [vmem:[%s3 + $0x3c] sm:$0xf]
  %v81 = vld [vmem:[%s4] sm:$0xf]
  %v82 = vld [vmem:[%s4 + $0x4] sm:$0xf]
  %v83 = vld [vmem:[%s4 + $0x8] sm:$0xf]
  %v84 = vld [vmem:[%s4 + $0xc] sm:$0xf]
  %v85 = vld [vmem:[%s4 + $0x10] sm:$0xf]
  %v86 = vld [vmem:[%s4 + $0x14] sm:$0xf]
  %v87 = vld [vmem:[%s4 + $0x18] sm:$0xf]
  %v88 = vld [vmem:[%s4 + $0x1c] sm:$0xf]
  %v89 = vld [vmem:[%s4 + $0x20] sm:$0xf]
  %v90 = vld [vmem:[%s4 + $0x24] sm:$0xf]
  %v91 = vld [vmem:[%s4 + $0x28] sm:$0xf]
  %v92 = vld [vmem:[%s4 + $0x2c] sm:$0xf]
  %v93 = vld [vmem:[%s4 + $0x30] sm:$0xf]
  %v94 = vld [vmem:[%s4 + $0x34] sm:$0xf]
  %v95 = vld [vmem:[%s4 + $0x38] sm:$0xf]
  %v96 = vld [vmem:[%s4 + $0x3c] sm:$0xf]
  %v113 = vunpack.c.l.b16 %v65
  %v114 = vunpack.c.l.b16 %v66
  %v115 = vunpack.c.l.b16 %v67
  %v116 = vunpack.c.l.b16 %v68
  %v117 = vunpack.c.l.b16 %v69
  %v118 = vunpack.c.l.b16 %v70
  %v119 = vunpack.c.l.b16 %v71
  %v120 = vunpack.c.l.b16 %v72
  %v121 = vunpack.c.l.b16 %v73
  %v122 = vunpack.c.l.b16 %v74
  %v123 = vunpack.c.l.b16 %v75
  %v124 = vunpack.c.l.b16 %v76
  %v125 = vunpack.c.l.b16 %v77
  %v126 = vunpack.c.l.b16 %v78
  %v127 = vunpack.c.l.b16 %v79
  %v128 = vunpack.c.l.b16 %v80
  %v129 = vpack.c.b16 %v114, %v113
  %v130 = vpack.c.b16 %v116, %v115
  %v131 = vpack.c.b16 %v118, %v117
  %v132 = vpack.c.b16 %v120, %v119
  %v133 = vpack.c.b16 %v122, %v121
  %v134 = vpack.c.b16 %v124, %v123
  %v135 = vpack.c.b16 %v126, %v125
  %v136 = vpack.c.b16 %v128, %v127
  %v161 = vunpack.c.l.b16 %v81
  %v162 = vunpack.c.l.b16 %v82
  %v163 = vunpack.c.l.b16 %v83
  %v164 = vunpack.c.l.b16 %v84
  %v165 = vunpack.c.l.b16 %v85
  %v166 = vunpack.c.l.b16 %v86
  %v167 = vunpack.c.l.b16 %v87
  %v168 = vunpack.c.l.b16 %v88
  %v169 = vunpack.c.l.b16 %v89
  %v170 = vunpack.c.l.b16 %v90
  %v171 = vunpack.c.l.b16 %v91
  %v172 = vunpack.c.l.b16 %v92
  %v173 = vunpack.c.l.b16 %v93
  %v174 = vunpack.c.l.b16 %v94
  %v175 = vunpack.c.l.b16 %v95
  %v176 = vunpack.c.l.b16 %v96
  %v177 = vpack.c.b16 %v162, %v161
  %v178 = vpack.c.b16 %v164, %v163
  %v179 = vpack.c.b16 %v166, %v165
  %v180 = vpack.c.b16 %v168, %v167
  %v181 = vpack.c.b16 %v170, %v169
  %v182 = vpack.c.b16 %v172, %v171
  %v183 = vpack.c.b16 %v174, %v173
  %v184 = vpack.c.b16 %v176, %v175
  %193 = vmatpush.bf16.msra.mxu0 %v184
  %194 = vmatpush.bf16.msra.mxu0 %v183
  %195 = vmatpush.bf16.msra.mxu0 %v182
  %196 = vmatpush.bf16.msra.mxu0 %v181
  %197 = vmatpush.bf16.msra.mxu0 %v180
  %198 = vmatpush.bf16.msra.mxu0 %v179
  %199 = vmatpush.bf16.msra.mxu0 %v178
  %200 = vmatpush.bf16.msra.mxu0 %v177
  %201 = vmatmul.bf16.gmra.mxu0 %v129
  %v202 = vpop.f32.mrf.mxu0
  %v203 = vadd.f32 0.0, %v202
  %v204 = vpop.f32.mrf.mxu0
  %v205 = vadd.f32 0.0, %v204
  %206 = vmatmul.bf16.gmra.mxu0 %v130
  %v207 = vpop.f32.mrf.mxu0
  %v208 = vadd.f32 0.0, %v207
  %v209 = vpop.f32.mrf.mxu0
  %v210 = vadd.f32 0.0, %v209
  %211 = vmatmul.bf16.gmra.mxu0 %v131
  %v212 = vpop.f32.mrf.mxu0
  %v213 = vadd.f32 0.0, %v212
  %v214 = vpop.f32.mrf.mxu0
  %v215 = vadd.f32 0.0, %v214
  %216 = vmatmul.bf16.gmra.mxu0 %v132
  %v217 = vpop.f32.mrf.mxu0
  %v218 = vadd.f32 0.0, %v217
  %v219 = vpop.f32.mrf.mxu0
  %v220 = vadd.f32 0.0, %v219
  %221 = vmatmul.bf16.gmra.mxu0 %v133
  %v222 = vpop.f32.mrf.mxu0
  %v223 = vadd.f32 0.0, %v222
  %v224 = vpop.f32.mrf.mxu0
  %v225 = vadd.f32 0.0, %v224
  %226 = vmatmul.bf16.gmra.mxu0 %v134
  %v227 = vpop.f32.mrf.mxu0
  %v228 = vadd.f32 0.0, %v227
  %v229 = vpop.f32.mrf.mxu0
  %v230 = vadd.f32 0.0, %v229
  %231 = vmatmul.bf16.gmra.mxu0 %v135
  %v232 = vpop.f32.mrf.mxu0
  %v233 = vadd.f32 0.0, %v232
  %v234 = vpop.f32.mrf.mxu0
  %v235 = vadd.f32 0.0, %v234
  %236 = vmatmul.bf16.gmra.mxu0 %v136
  %v237 = vpop.f32.mrf.mxu0
  %v238 = vadd.f32 0.0, %v237
  %v239 = vpop.f32.mrf.mxu0
  %v240 = vadd.f32 0.0, %v239
  %241 = vdwg.mxu0
  %v242 = vadd.f32 %v49, %v203
  %v243 = vadd.f32 %v50, %v205
  %v244 = vadd.f32 %v51, %v208
  %v245 = vadd.f32 %v52, %v210
  %v246 = vadd.f32 %v53, %v213
  %v247 = vadd.f32 %v54, %v215
  %v248 = vadd.f32 %v55, %v218
  %v249 = vadd.f32 %v56, %v220
  %v250 = vadd.f32 %v57, %v223
  %v251 = vadd.f32 %v58, %v225
  %v252 = vadd.f32 %v59, %v228
  %v253 = vadd.f32 %v60, %v230
  %v254 = vadd.f32 %v61, %v233
  %v255 = vadd.f32 %v62, %v235
  %v256 = vadd.f32 %v63, %v238
  %v257 = vadd.f32 %v64, %v240
  %258 = vst [vmem:[#allocation2] sm:$0xff] %v242
  %259 = vst [vmem:[#allocation2 + $0x8] sm:$0xff] %v243
  %260 = vst [vmem:[#allocation2 + $0x10] sm:$0xff] %v244
  %261 = vst [vmem:[#allocation2 + $0x18] sm:$0xff] %v245
  %262 = vst [vmem:[#allocation2 + $0x20] sm:$0xff] %v246
  %263 = vst [vmem:[#allocation2 + $0x28] sm:$0xff] %v247
  %264 = vst [vmem:[#allocation2 + $0x30] sm:$0xff] %v248
  %265 = vst [vmem:[#allocation2 + $0x38] sm:$0xff] %v249
  %266 = vst [vmem:[#allocation2 + $0x40] sm:$0xff] %v250
  %267 = vst [vmem:[#allocation2 + $0x48] sm:$0xff] %v251
  %268 = vst [vmem:[#allocation2 + $0x50] sm:$0xff] %v252
  %269 = vst [vmem:[#allocation2 + $0x58] sm:$0xff] %v253
  %270 = vst [vmem:[#allocation2 + $0x60] sm:$0xff] %v254
  %271 = vst [vmem:[#allocation2 + $0x68] sm:$0xff] %v255
  %272 = vst [vmem:[#allocation2 + $0x70] sm:$0xff] %v256
  %273 = vst [vmem:[#allocation2 + $0x78] sm:$0xff] %v257
  // Predicated region
  $region38: #{gnn_stack_forward.6} parent=0 // pred_check
    %p274 = pneg %p29
  $region39: #{gnn_stack_forward.6} parent=0 // pred_check_branch
    %276 = sbr.rel (%p274) target = $region41
  $region40: #{gnn_stack_forward.6} parent=0 // pred_region
    %v277 = vld [vmem:[#allocation2] sm:$0xff]
    %v278 = vld [vmem:[#allocation2 + $0x8] sm:$0xff]
    %v279 = vld [vmem:[#allocation2 + $0x10] sm:$0xff]
    %v280 = vld [vmem:[#allocation2 + $0x18] sm:$0xff]
    %v281 = vld [vmem:[#allocation2 + $0x20] sm:$0xff]
    %v282 = vld [vmem:[#allocation2 + $0x28] sm:$0xff]
    %v283 = vld [vmem:[#allocation2 + $0x30] sm:$0xff]
    %v284 = vld [vmem:[#allocation2 + $0x38] sm:$0xff]
    %v285 = vld [vmem:[#allocation2 + $0x40] sm:$0xff]
    %v286 = vld [vmem:[#allocation2 + $0x48] sm:$0xff]
    %v287 = vld [vmem:[#allocation2 + $0x50] sm:$0xff]
    %v288 = vld [vmem:[#allocation2 + $0x58] sm:$0xff]
    %v289 = vld [vmem:[#allocation2 + $0x60] sm:$0xff]
    %v290 = vld [vmem:[#allocation2 + $0x68] sm:$0xff]
    %v291 = vld [vmem:[#allocation2 + $0x70] sm:$0xff]
    %v292 = vld [vmem:[#allocation2 + $0x78] sm:$0xff]
    %v293 = vld [vmem:[%s2] sm:$0xff]
    %v294 = vld [vmem:[%s2 + $0x8] sm:$0xff]
    %v295 = vld [vmem:[%s2 + $0x10] sm:$0xff]
    %v296 = vld [vmem:[%s2 + $0x18] sm:$0xff]
    %v297 = vld [vmem:[%s2 + $0x20] sm:$0xff]
    %v298 = vld [vmem:[%s2 + $0x28] sm:$0xff]
    %v299 = vld [vmem:[%s2 + $0x30] sm:$0xff]
    %v300 = vld [vmem:[%s2 + $0x38] sm:$0xff]
    %v301 = vld [vmem:[%s2 + $0x40] sm:$0xff]
    %v302 = vld [vmem:[%s2 + $0x48] sm:$0xff]
    %v303 = vld [vmem:[%s2 + $0x50] sm:$0xff]
    %v304 = vld [vmem:[%s2 + $0x58] sm:$0xff]
    %v305 = vld [vmem:[%s2 + $0x60] sm:$0xff]
    %v306 = vld [vmem:[%s2 + $0x68] sm:$0xff]
    %v307 = vld [vmem:[%s2 + $0x70] sm:$0xff]
    %v308 = vld [vmem:[%s2 + $0x78] sm:$0xff]
    %310 = vset.pattern.permute.xlu0 0
    %311 = vperm.xlu0 %310, %v293
    %v312 = vpop.permute.xlu0 %311
    %315 = vset.pattern.permute.xlu0 0
    %316 = vperm.xlu0 %315, %v294
    %v317 = vpop.permute.xlu0 %316
    %320 = vset.pattern.permute.xlu0 0
    %321 = vperm.xlu0 %320, %v295
    %v322 = vpop.permute.xlu0 %321
    %325 = vset.pattern.permute.xlu0 0
    %326 = vperm.xlu0 %325, %v296
    %v327 = vpop.permute.xlu0 %326
    %330 = vset.pattern.permute.xlu0 0
    %331 = vperm.xlu0 %330, %v297
    %v332 = vpop.permute.xlu0 %331
    %335 = vset.pattern.permute.xlu0 0
    %336 = vperm.xlu0 %335, %v298
    %v337 = vpop.permute.xlu0 %336
    %340 = vset.pattern.permute.xlu0 0
    %341 = vperm.xlu0 %340, %v299
    %v342 = vpop.permute.xlu0 %341
    %345 = vset.pattern.permute.xlu0 0
    %346 = vperm.xlu0 %345, %v300
    %v347 = vpop.permute.xlu0 %346
    %350 = vset.pattern.permute.xlu0 0
    %351 = vperm.xlu0 %350, %v301
    %v352 = vpop.permute.xlu0 %351
    %355 = vset.pattern.permute.xlu0 0
    %356 = vperm.xlu0 %355, %v302
    %v357 = vpop.permute.xlu0 %356
    %360 = vset.pattern.permute.xlu0 0
    %361 = vperm.xlu0 %360, %v303
    %v362 = vpop.permute.xlu0 %361
    %365 = vset.pattern.permute.xlu0 0
    %366 = vperm.xlu0 %365, %v304
    %v367 = vpop.permute.xlu0 %366
    %370 = vset.pattern.permute.xlu0 0
    %371 = vperm.xlu0 %370, %v305
    %v372 = vpop.permute.xlu0 %371
    %375 = vset.pattern.permute.xlu0 0
    %376 = vperm.xlu0 %375, %v306
    %v377 = vpop.permute.xlu0 %376
    %380 = vset.pattern.permute.xlu0 0
    %381 = vperm.xlu0 %380, %v307
    %v382 = vpop.permute.xlu0 %381
    %385 = vset.pattern.permute.xlu0 0
    %386 = vperm.xlu0 %385, %v308
    %v387 = vpop.permute.xlu0 %386
    %v389 = vmul.f32 %v277, %v312
    %v390 = vmul.f32 %v278, %v317
    %v391 = vmul.f32 %v279, %v322
    %v392 = vmul.f32 %v280, %v327
    %v393 = vmul.f32 %v281, %v332
    %v394 = vmul.f32 %v282, %v337
    %v395 = vmul.f32 %v283, %v342
    %v396 = vmul.f32 %v284, %v347
    %v397 = vmul.f32 %v285, %v352
    %v398 = vmul.f32 %v286, %v357
    %v399 = vmul.f32 %v287, %v362
    %v400 = vmul.f32 %v288, %v367
    %v401 = vmul.f32 %v289, %v372
    %v402 = vmul.f32 %v290, %v377
    %v403 = vmul.f32 %v291, %v382
    %v404 = vmul.f32 %v292, %v387
    %v405 = vld [vmem:[%s1] sm:$0xf]
    %v406 = vld [vmem:[%s1 + $0x4] sm:$0xf]
    %v407 = vld [vmem:[%s1 + $0x8] sm:$0xf]
    %v408 = vld [vmem:[%s1 + $0xc] sm:$0xf]
    %v409 = vld [vmem:[%s1 + $0x10] sm:$0xf]
    %v410 = vld [vmem:[%s1 + $0x14] sm:$0xf]
    %v411 = vld [vmem:[%s1 + $0x18] sm:$0xf]
    %v412 = vld [vmem:[%s1 + $0x1c] sm:$0xf]
    %v413 = vld [vmem:[%s1 + $0x20] sm:$0xf]
    %v414 = vld [vmem:[%s1 + $0x24] sm:$0xf]
    %v415 = vld [vmem:[%s1 + $0x28] sm:$0xf]
    %v416 = vld [vmem:[%s1 + $0x2c] sm:$0xf]
    %v417 = vld [vmem:[%s1 + $0x30] sm:$0xf]
    %v418 = vld [vmem:[%s1 + $0x34] sm:$0xf]
    %v419 = vld [vmem:[%s1 + $0x38] sm:$0xf]
    %v420 = vld [vmem:[%s1 + $0x3c] sm:$0xf]
    %v421 = vld [vmem:[%s5] sm:$0xff]
    %v422 = vld [vmem:[%s5 + $0x8] sm:$0xff]
    %v423 = vld [vmem:[%s5 + $0x10] sm:$0xff]
    %v424 = vld [vmem:[%s5 + $0x18] sm:$0xff]
    %v425 = vld [vmem:[%s5 + $0x20] sm:$0xff]
    %v426 = vld [vmem:[%s5 + $0x28] sm:$0xff]
    %v427 = vld [vmem:[%s5 + $0x30] sm:$0xff]
    %v428 = vld [vmem:[%s5 + $0x38] sm:$0xff]
    %v429 = vld [vmem:[%s5 + $0x40] sm:$0xff]
    %v430 = vld [vmem:[%s5 + $0x48] sm:$0xff]
    %v431 = vld [vmem:[%s5 + $0x50] sm:$0xff]
    %v432 = vld [vmem:[%s5 + $0x58] sm:$0xff]
    %v433 = vld [vmem:[%s5 + $0x60] sm:$0xff]
    %v434 = vld [vmem:[%s5 + $0x68] sm:$0xff]
    %v435 = vld [vmem:[%s5 + $0x70] sm:$0xff]
    %v436 = vld [vmem:[%s5 + $0x78] sm:$0xff]
    %v437 = vpack.c.bf16 %v390, %v389
    %v438 = vpack.c.bf16 %v392, %v391
    %v439 = vpack.c.bf16 %v394, %v393
    %v440 = vpack.c.bf16 %v396, %v395
    %v441 = vpack.c.bf16 %v398, %v397
    %v442 = vpack.c.bf16 %v400, %v399
    %v443 = vpack.c.bf16 %v402, %v401
    %v444 = vpack.c.bf16 %v404, %v403
    %v445 = vld [vmem:[%s6] sm:$0xff]
    %v446 = vld [vmem:[%s6 + $0x8] sm:$0xff]
    %v447 = vld [vmem:[%s6 + $0x10] sm:$0xff]
    %v448 = vld [vmem:[%s6 + $0x18] sm:$0xff]
    %v449 = vld [vmem:[%s6 + $0x20] sm:$0xff]
    %v450 = vld [vmem:[%s6 + $0x28] sm:$0xff]
    %v451 = vld [vmem:[%s6 + $0x30] sm:$0xff]
    %v452 = vld [vmem:[%s6 + $0x38] sm:$0xff]
    %v453 = vld [vmem:[%s6 + $0x40] sm:$0xff]
    %v454 = vld [vmem:[%s6 + $0x48] sm:$0xff]
    %v455 = vld [vmem:[%s6 + $0x50] sm:$0xff]
    %v456 = vld [vmem:[%s6 + $0x58] sm:$0xff]
    %v457 = vld [vmem:[%s6 + $0x60] sm:$0xff]
    %v458 = vld [vmem:[%s6 + $0x68] sm:$0xff]
    %v459 = vld [vmem:[%s6 + $0x70] sm:$0xff]
    %v460 = vld [vmem:[%s6 + $0x78] sm:$0xff]
    %v477 = vunpack.c.l.b16 %v445
    %v478 = vunpack.c.h.b16 %v445
    %v479 = vunpack.c.l.b16 %v446
    %v480 = vunpack.c.h.b16 %v446
    %v481 = vunpack.c.l.b16 %v447
    %v482 = vunpack.c.h.b16 %v447
    %v483 = vunpack.c.l.b16 %v448
    %v484 = vunpack.c.h.b16 %v448
    %v485 = vunpack.c.l.b16 %v449
    %v486 = vunpack.c.h.b16 %v449
    %v487 = vunpack.c.l.b16 %v450
    %v488 = vunpack.c.h.b16 %v450
    %v489 = vunpack.c.l.b16 %v451
    %v490 = vunpack.c.h.b16 %v451
    %v491 = vunpack.c.l.b16 %v452
    %v492 = vunpack.c.h.b16 %v452
    %v493 = vunpack.c.l.b16 %v453
    %v494 = vunpack.c.h.b16 %v453
    %v495 = vunpack.c.l.b16 %v454
    %v496 = vunpack.c.h.b16 %v454
    %v497 = vunpack.c.l.b16 %v455
    %v498 = vunpack.c.h.b16 %v455
    %v499 = vunpack.c.l.b16 %v456
    %v500 = vunpack.c.h.b16 %v456
    %v501 = vunpack.c.l.b16 %v457
    %v502 = vunpack.c.h.b16 %v457
    %v503 = vunpack.c.l.b16 %v458
    %v504 = vunpack.c.h.b16 %v458
    %v505 = vunpack.c.l.b16 %v459
    %v506 = vunpack.c.h.b16 %v459
    %v507 = vunpack.c.l.b16 %v460
    %v508 = vunpack.c.h.b16 %v460
    %v509 = vpack.c.b16 %v479, %v477
    %v510 = vpack.c.b16 %v480, %v478
    %v511 = vpack.c.b16 %v483, %v481
    %v512 = vpack.c.b16 %v484, %v482
    %v513 = vpack.c.b16 %v487, %v485
    %v514 = vpack.c.b16 %v488, %v486
    %v515 = vpack.c.b16 %v491, %v489
    %v516 = vpack.c.b16 %v492, %v490
    %v517 = vpack.c.b16 %v495, %v493
    %v518 = vpack.c.b16 %v496, %v494
    %v519 = vpack.c.b16 %v499, %v497
    %v520 = vpack.c.b16 %v500, %v498
    %v521 = vpack.c.b16 %v503, %v501
    %v522 = vpack.c.b16 %v504, %v502
    %v523 = vpack.c.b16 %v507, %v505
    %v524 = vpack.c.b16 %v508, %v506
    %541 = vmatpush.bf16.msra.mxu0 %v523
    %542 = vmatpush.bf16.msra.mxu0 %v521
    %543 = vmatpush.bf16.msra.mxu0 %v519
    %544 = vmatpush.bf16.msra.mxu0 %v517
    %545 = vmatpush.bf16.msra.mxu0 %v515
    %546 = vmatpush.bf16.msra.mxu0 %v513
    %547 = vmatpush.bf16.msra.mxu0 %v511
    %548 = vmatpush.bf16.msra.mxu0 %v509
    %549 = vmatmul.bf16.gmra.mxu0 %v437
    %v550 = vpop.f32.mrf.mxu0
    %v551 = vadd.f32 0.0, %v550
    %v552 = vpop.f32.mrf.mxu0
    %v553 = vadd.f32 0.0, %v552
    %554 = vmatmul.bf16.gmra.mxu0 %v438
    %v555 = vpop.f32.mrf.mxu0
    %v556 = vadd.f32 0.0, %v555
    %v557 = vpop.f32.mrf.mxu0
    %v558 = vadd.f32 0.0, %v557
    %559 = vmatmul.bf16.gmra.mxu0 %v439
    %v560 = vpop.f32.mrf.mxu0
    %v561 = vadd.f32 0.0, %v560
    %v562 = vpop.f32.mrf.mxu0
    %v563 = vadd.f32 0.0, %v562
    %564 = vmatmul.bf16.gmra.mxu0 %v440
    %v565 = vpop.f32.mrf.mxu0
    %v566 = vadd.f32 0.0, %v565
    %v567 = vpop.f32.mrf.mxu0
    %v568 = vadd.f32 0.0, %v567
    %569 = vmatmul.bf16.gmra.mxu0 %v441
    %v570 = vpop.f32.mrf.mxu0
    %v571 = vadd.f32 0.0, %v570
    %v572 = vpop.f32.mrf.mxu0
    %v573 = vadd.f32 0.0, %v572
    %574 = vmatmul.bf16.gmra.mxu0 %v442
    %v575 = vpop.f32.mrf.mxu0
    %v576 = vadd.f32 0.0, %v575
    %v577 = vpop.f32.mrf.mxu0
    %v578 = vadd.f32 0.0, %v577
    %579 = vmatmul.bf16.gmra.mxu0 %v443
    %v580 = vpop.f32.mrf.mxu0
    %v581 = vadd.f32 0.0, %v580
    %v582 = vpop.f32.mrf.mxu0
    %v583 = vadd.f32 0.0, %v582
    %584 = vmatmul.bf16.gmra.mxu0 %v444
    %v585 = vpop.f32.mrf.mxu0
    %v586 = vadd.f32 0.0, %v585
    %v587 = vpop.f32.mrf.mxu0
    %v588 = vadd.f32 0.0, %v587
    %589 = vdwg.mxu0
    %590 = vmatpush.bf16.msra.mxu0 %v524
    %591 = vmatpush.bf16.msra.mxu0 %v522
    %592 = vmatpush.bf16.msra.mxu0 %v520
    %593 = vmatpush.bf16.msra.mxu0 %v518
    %594 = vmatpush.bf16.msra.mxu0 %v516
    %595 = vmatpush.bf16.msra.mxu0 %v514
    %596 = vmatpush.bf16.msra.mxu0 %v512
    %597 = vmatpush.bf16.msra.mxu0 %v510
    %598 = vmatmul.bf16.gmra.mxu0 %v437
    %v599 = vpop.f32.mrf.mxu0
    %v600 = vadd.f32 0.0, %v599
    %v601 = vpop.f32.mrf.mxu0
    %v602 = vadd.f32 0.0, %v601
    %603 = vmatmul.bf16.gmra.mxu0 %v438
    %v604 = vpop.f32.mrf.mxu0
    %v605 = vadd.f32 0.0, %v604
    %v606 = vpop.f32.mrf.mxu0
    %v607 = vadd.f32 0.0, %v606
    %608 = vmatmul.bf16.gmra.mxu0 %v439
    %v609 = vpop.f32.mrf.mxu0
    %v610 = vadd.f32 0.0, %v609
    %v611 = vpop.f32.mrf.mxu0
    %v612 = vadd.f32 0.0, %v611
    %613 = vmatmul.bf16.gmra.mxu0 %v440
    %v614 = vpop.f32.mrf.mxu0
    %v615 = vadd.f32 0.0, %v614
    %v616 = vpop.f32.mrf.mxu0
    %v617 = vadd.f32 0.0, %v616
    %618 = vmatmul.bf16.gmra.mxu0 %v441
    %v619 = vpop.f32.mrf.mxu0
    %v620 = vadd.f32 0.0, %v619
    %v621 = vpop.f32.mrf.mxu0
    %v622 = vadd.f32 0.0, %v621
    %623 = vmatmul.bf16.gmra.mxu0 %v442
    %v624 = vpop.f32.mrf.mxu0
    %v625 = vadd.f32 0.0, %v624
    %v626 = vpop.f32.mrf.mxu0
    %v627 = vadd.f32 0.0, %v626
    %628 = vmatmul.bf16.gmra.mxu0 %v443
    %v629 = vpop.f32.mrf.mxu0
    %v630 = vadd.f32 0.0, %v629
    %v631 = vpop.f32.mrf.mxu0
    %v632 = vadd.f32 0.0, %v631
    %633 = vmatmul.bf16.gmra.mxu0 %v444
    %v634 = vpop.f32.mrf.mxu0
    %v635 = vadd.f32 0.0, %v634
    %v636 = vpop.f32.mrf.mxu0
    %v637 = vadd.f32 0.0, %v636
    %638 = vdwg.mxu0
    %v655 = vunpack.c.l.b16 %v405
    %v656 = vunpack.c.l.b16 %v406
    %v657 = vunpack.c.l.b16 %v407
    %v658 = vunpack.c.l.b16 %v408
    %v659 = vunpack.c.l.b16 %v409
    %v660 = vunpack.c.l.b16 %v410
    %v661 = vunpack.c.l.b16 %v411
    %v662 = vunpack.c.l.b16 %v412
    %v663 = vunpack.c.l.b16 %v413
    %v664 = vunpack.c.l.b16 %v414
    %v665 = vunpack.c.l.b16 %v415
    %v666 = vunpack.c.l.b16 %v416
    %v667 = vunpack.c.l.b16 %v417
    %v668 = vunpack.c.l.b16 %v418
    %v669 = vunpack.c.l.b16 %v419
    %v670 = vunpack.c.l.b16 %v420
    %v671 = vpack.c.b16 %v656, %v655
    %v672 = vpack.c.b16 %v658, %v657
    %v673 = vpack.c.b16 %v660, %v659
    %v674 = vpack.c.b16 %v662, %v661
    %v675 = vpack.c.b16 %v664, %v663
    %v676 = vpack.c.b16 %v666, %v665
    %v677 = vpack.c.b16 %v668, %v667
    %v678 = vpack.c.b16 %v670, %v669
    %v703 = vunpack.c.l.b16 %v421
    %v704 = vunpack.c.h.b16 %v421
    %v705 = vunpack.c.l.b16 %v422
    %v706 = vunpack.c.h.b16 %v422
    %v707 = vunpack.c.l.b16 %v423
    %v708 = vunpack.c.h.b16 %v423
    %v709 = vunpack.c.l.b16 %v424
    %v710 = vunpack.c.h.b16 %v424
    %v711 = vunpack.c.l.b16 %v425
    %v712 = vunpack.c.h.b16 %v425
    %v713 = vunpack.c.l.b16 %v426
    %v714 = vunpack.c.h.b16 %v426
    %v715 = vunpack.c.l.b16 %v427
    %v716 = vunpack.c.h.b16 %v427
    %v717 = vunpack.c.l.b16 %v428
    %v718 = vunpack.c.h.b16 %v428
    %v719 = vunpack.c.l.b16 %v429
    %v720 = vunpack.c.h.b16 %v429
    %v721 = vunpack.c.l.b16 %v430
    %v722 = vunpack.c.h.b16 %v430
    %v723 = vunpack.c.l.b16 %v431
    %v724 = vunpack.c.h.b16 %v431
    %v725 = vunpack.c.l.b16 %v432
    %v726 = vunpack.c.h.b16 %v432
    %v727 = vunpack.c.l.b16 %v433
    %v728 = vunpack.c.h.b16 %v433
    %v729 = vunpack.c.l.b16 %v434
    %v730 = vunpack.c.h.b16 %v434
    %v731 = vunpack.c.l.b16 %v435
    %v732 = vunpack.c.h.b16 %v435
    %v733 = vunpack.c.l.b16 %v436
    %v734 = vunpack.c.h.b16 %v436
    %v735 = vpack.c.b16 %v705, %v703
    %v736 = vpack.c.b16 %v706, %v704
    %v737 = vpack.c.b16 %v709, %v707
    %v738 = vpack.c.b16 %v710, %v708
    %v739 = vpack.c.b16 %v713, %v711
    %v740 = vpack.c.b16 %v714, %v712
    %v741 = vpack.c.b16 %v717, %v715
    %v742 = vpack.c.b16 %v718, %v716
    %v743 = vpack.c.b16 %v721, %v719
    %v744 = vpack.c.b16 %v722, %v720
    %v745 = vpack.c.b16 %v725, %v723
    %v746 = vpack.c.b16 %v726, %v724
    %v747 = vpack.c.b16 %v729, %v727
    %v748 = vpack.c.b16 %v730, %v728
    %v749 = vpack.c.b16 %v733, %v731
    %v750 = vpack.c.b16 %v734, %v732
    %767 = vmatpush.bf16.msra.mxu0 %v749
    %768 = vmatpush.bf16.msra.mxu0 %v747
    %769 = vmatpush.bf16.msra.mxu0 %v745
    %770 = vmatpush.bf16.msra.mxu0 %v743
    %771 = vmatpush.bf16.msra.mxu0 %v741
    %772 = vmatpush.bf16.msra.mxu0 %v739
    %773 = vmatpush.bf16.msra.mxu0 %v737
    %774 = vmatpush.bf16.msra.mxu0 %v735
    %775 = vmatmul.bf16.gmra.mxu0 %v671
    %v776 = vpop.f32.mrf.mxu0
    %v777 = vadd.f32 %v551, %v776
    %v778 = vpop.f32.mrf.mxu0
    %v779 = vadd.f32 %v553, %v778
    %780 = vmatmul.bf16.gmra.mxu0 %v672
    %v781 = vpop.f32.mrf.mxu0
    %v782 = vadd.f32 %v556, %v781
    %v783 = vpop.f32.mrf.mxu0
    %v784 = vadd.f32 %v558, %v783
    %785 = vmatmul.bf16.gmra.mxu0 %v673
    %v786 = vpop.f32.mrf.mxu0
    %v787 = vadd.f32 %v561, %v786
    %v788 = vpop.f32.mrf.mxu0
    %v789 = vadd.f32 %v563, %v788
    %790 = vmatmul.bf16.gmra.mxu0 %v674
    %v791 = vpop.f32.mrf.mxu0
    %v792 = vadd.f32 %v566, %v791
    %v793 = vpop.f32.mrf.mxu0
    %v794 = vadd.f32 %v568, %v793
    %795 = vmatmul.bf16.gmra.mxu0 %v675
    %v796 = vpop.f32.mrf.mxu0
    %v797 = vadd.f32 %v571, %v796
    %v798 = vpop.f32.mrf.mxu0
    %v799 = vadd.f32 %v573, %v798
    %800 = vmatmul.bf16.gmra.mxu0 %v676
    %v801 = vpop.f32.mrf.mxu0
    %v802 = vadd.f32 %v576, %v801
    %v803 = vpop.f32.mrf.mxu0
    %v804 = vadd.f32 %v578, %v803
    %805 = vmatmul.bf16.gmra.mxu0 %v677
    %v806 = vpop.f32.mrf.mxu0
    %v807 = vadd.f32 %v581, %v806
    %v808 = vpop.f32.mrf.mxu0
    %v809 = vadd.f32 %v583, %v808
    %810 = vmatmul.bf16.gmra.mxu0 %v678
    %v811 = vpop.f32.mrf.mxu0
    %v812 = vadd.f32 %v586, %v811
    %v813 = vpop.f32.mrf.mxu0
    %v814 = vadd.f32 %v588, %v813
    %815 = vdwg.mxu0
    %816 = vmatpush.bf16.msra.mxu0 %v750
    %817 = vmatpush.bf16.msra.mxu0 %v748
    %818 = vmatpush.bf16.msra.mxu0 %v746
    %819 = vmatpush.bf16.msra.mxu0 %v744
    %820 = vmatpush.bf16.msra.mxu0 %v742
    %821 = vmatpush.bf16.msra.mxu0 %v740
    %822 = vmatpush.bf16.msra.mxu0 %v738
    %823 = vmatpush.bf16.msra.mxu0 %v736
    %824 = vmatmul.bf16.gmra.mxu0 %v671
    %v825 = vpop.f32.mrf.mxu0
    %v826 = vadd.f32 %v600, %v825
    %v827 = vpop.f32.mrf.mxu0
    %v828 = vadd.f32 %v602, %v827
    %829 = vmatmul.bf16.gmra.mxu0 %v672
    %v830 = vpop.f32.mrf.mxu0
    %v831 = vadd.f32 %v605, %v830
    %v832 = vpop.f32.mrf.mxu0
    %v833 = vadd.f32 %v607, %v832
    %834 = vmatmul.bf16.gmra.mxu0 %v673
    %v835 = vpop.f32.mrf.mxu0
    %v836 = vadd.f32 %v610, %v835
    %v837 = vpop.f32.mrf.mxu0
    %v838 = vadd.f32 %v612, %v837
    %839 = vmatmul.bf16.gmra.mxu0 %v674
    %v840 = vpop.f32.mrf.mxu0
    %v841 = vadd.f32 %v615, %v840
    %v842 = vpop.f32.mrf.mxu0
    %v843 = vadd.f32 %v617, %v842
    %844 = vmatmul.bf16.gmra.mxu0 %v675
    %v845 = vpop.f32.mrf.mxu0
    %v846 = vadd.f32 %v620, %v845
    %v847 = vpop.f32.mrf.mxu0
    %v848 = vadd.f32 %v622, %v847
    %849 = vmatmul.bf16.gmra.mxu0 %v676
    %v850 = vpop.f32.mrf.mxu0
    %v851 = vadd.f32 %v625, %v850
    %v852 = vpop.f32.mrf.mxu0
    %v853 = vadd.f32 %v627, %v852
    %854 = vmatmul.bf16.gmra.mxu0 %v677
    %v855 = vpop.f32.mrf.mxu0
    %v856 = vadd.f32 %v630, %v855
    %v857 = vpop.f32.mrf.mxu0
    %v858 = vadd.f32 %v632, %v857
    %859 = vmatmul.bf16.gmra.mxu0 %v678
    %v860 = vpop.f32.mrf.mxu0
    %v861 = vadd.f32 %v635, %v860
    %v862 = vpop.f32.mrf.mxu0
    %v863 = vadd.f32 %v637, %v862
    %864 = vdwg.mxu0
    %v865 = vld [vmem:[%s7] sm:$0x3]
    %v867 = vperm.slane %v865, 0
    %v868 = vperm.slane %v865, 1
    %v871 = vadd.f32 %v777, %v867
    %v872 = vadd.f32 %v826, %v868
    %v873 = vadd.f32 %v779, %v867
    %v874 = vadd.f32 %v828, %v868
    %v875 = vadd.f32 %v782, %v867
    %v876 = vadd.f32 %v831, %v868
    %v877 = vadd.f32 %v784, %v867
    %v878 = vadd.f32 %v833, %v868
    %v879 = vadd.f32 %v787, %v867
    %v880 = vadd.f32 %v836, %v868
    %v881 = vadd.f32 %v789, %v867
    %v882 = vadd.f32 %v838, %v868
    %v883 = vadd.f32 %v792, %v867
    %v884 = vadd.f32 %v841, %v868
    %v885 = vadd.f32 %v794, %v867
    %v886 = vadd.f32 %v843, %v868
    %v887 = vadd.f32 %v797, %v867
    %v888 = vadd.f32 %v846, %v868
    %v889 = vadd.f32 %v799, %v867
    %v890 = vadd.f32 %v848, %v868
    %v891 = vadd.f32 %v802, %v867
    %v892 = vadd.f32 %v851, %v868
    %v893 = vadd.f32 %v804, %v867
    %v894 = vadd.f32 %v853, %v868
    %v895 = vadd.f32 %v807, %v867
    %v896 = vadd.f32 %v856, %v868
    %v897 = vadd.f32 %v809, %v867
    %v898 = vadd.f32 %v858, %v868
    %v899 = vadd.f32 %v812, %v867
    %v900 = vadd.f32 %v861, %v868
    %v901 = vadd.f32 %v814, %v867
    %v902 = vadd.f32 %v863, %v868
    %v903 = vld [vmem:[%s0] sm:$0xff]
    %v904 = vld [vmem:[%s0 + $0x8] sm:$0xff]
    %v905 = vld [vmem:[%s0 + $0x10] sm:$0xff]
    %v906 = vld [vmem:[%s0 + $0x18] sm:$0xff]
    %v907 = vld [vmem:[%s0 + $0x20] sm:$0xff]
    %v908 = vld [vmem:[%s0 + $0x28] sm:$0xff]
    %v909 = vld [vmem:[%s0 + $0x30] sm:$0xff]
    %v910 = vld [vmem:[%s0 + $0x38] sm:$0xff]
    %v911 = vld [vmem:[%s0 + $0x40] sm:$0xff]
    %v912 = vld [vmem:[%s0 + $0x48] sm:$0xff]
    %v913 = vld [vmem:[%s0 + $0x50] sm:$0xff]
    %v914 = vld [vmem:[%s0 + $0x58] sm:$0xff]
    %v915 = vld [vmem:[%s0 + $0x60] sm:$0xff]
    %v916 = vld [vmem:[%s0 + $0x68] sm:$0xff]
    %v917 = vld [vmem:[%s0 + $0x70] sm:$0xff]
    %v918 = vld [vmem:[%s0 + $0x78] sm:$0xff]
    %920 = vset.pattern.permute.xlu0 0
    %921 = vperm.xlu0 %920, %v903
    %v922 = vpop.permute.xlu0 %921
    %925 = vset.pattern.permute.xlu0 0
    %926 = vperm.xlu0 %925, %v904
    %v927 = vpop.permute.xlu0 %926
    %930 = vset.pattern.permute.xlu0 0
    %931 = vperm.xlu0 %930, %v905
    %v932 = vpop.permute.xlu0 %931
    %935 = vset.pattern.permute.xlu0 0
    %936 = vperm.xlu0 %935, %v906
    %v937 = vpop.permute.xlu0 %936
    %940 = vset.pattern.permute.xlu0 0
    %941 = vperm.xlu0 %940, %v907
    %v942 = vpop.permute.xlu0 %941
    %945 = vset.pattern.permute.xlu0 0
    %946 = vperm.xlu0 %945, %v908
    %v947 = vpop.permute.xlu0 %946
    %950 = vset.pattern.permute.xlu0 0
    %951 = vperm.xlu0 %950, %v909
    %v952 = vpop.permute.xlu0 %951
    %955 = vset.pattern.permute.xlu0 0
    %956 = vperm.xlu0 %955, %v910
    %v957 = vpop.permute.xlu0 %956
    %960 = vset.pattern.permute.xlu0 0
    %961 = vperm.xlu0 %960, %v911
    %v962 = vpop.permute.xlu0 %961
    %965 = vset.pattern.permute.xlu0 0
    %966 = vperm.xlu0 %965, %v912
    %v967 = vpop.permute.xlu0 %966
    %970 = vset.pattern.permute.xlu0 0
    %971 = vperm.xlu0 %970, %v913
    %v972 = vpop.permute.xlu0 %971
    %975 = vset.pattern.permute.xlu0 0
    %976 = vperm.xlu0 %975, %v914
    %v977 = vpop.permute.xlu0 %976
    %980 = vset.pattern.permute.xlu0 0
    %981 = vperm.xlu0 %980, %v915
    %v982 = vpop.permute.xlu0 %981
    %985 = vset.pattern.permute.xlu0 0
    %986 = vperm.xlu0 %985, %v916
    %v987 = vpop.permute.xlu0 %986
    %990 = vset.pattern.permute.xlu0 0
    %991 = vperm.xlu0 %990, %v917
    %v992 = vpop.permute.xlu0 %991
    %995 = vset.pattern.permute.xlu0 0
    %996 = vperm.xlu0 %995, %v918
    %v997 = vpop.permute.xlu0 %996
    %v999 = vmul.f32 %v922, %v871
    %v1000 = vmul.f32 %v927, %v873
    %v1001 = vmul.f32 %v932, %v875
    %v1002 = vmul.f32 %v937, %v877
    %v1003 = vmul.f32 %v942, %v879
    %v1004 = vmul.f32 %v947, %v881
    %v1005 = vmul.f32 %v952, %v883
    %v1006 = vmul.f32 %v957, %v885
    %v1007 = vmul.f32 %v962, %v887
    %v1008 = vmul.f32 %v967, %v889
    %v1009 = vmul.f32 %v972, %v891
    %v1010 = vmul.f32 %v977, %v893
    %v1011 = vmul.f32 %v982, %v895
    %v1012 = vmul.f32 %v987, %v897
    %v1013 = vmul.f32 %v992, %v899
    %v1014 = vmul.f32 %v997, %v901
    %1015 = vset.pattern.permute.xlu0 1
    %1016 = vperm.xlu0 %1015, %v903
    %v1017 = vpop.permute.xlu0 %1016
    %1019 = vset.pattern.permute.xlu0 1
    %1020 = vperm.xlu0 %1019, %v904
    %v1021 = vpop.permute.xlu0 %1020
    %1023 = vset.pattern.permute.xlu0 1
    %1024 = vperm.xlu0 %1023, %v905
    %v1025 = vpop.permute.xlu0 %1024
    %1027 = vset.pattern.permute.xlu0 1
    %1028 = vperm.xlu0 %1027, %v906
    %v1029 = vpop.permute.xlu0 %1028
    %1031 = vset.pattern.permute.xlu0 1
    %1032 = vperm.xlu0 %1031, %v907
    %v1033 = vpop.permute.xlu0 %1032
    %1035 = vset.pattern.permute.xlu0 1
    %1036 = vperm.xlu0 %1035, %v908
    %v1037 = vpop.permute.xlu0 %1036
    %1039 = vset.pattern.permute.xlu0 1
    %1040 = vperm.xlu0 %1039, %v909
    %v1041 = vpop.permute.xlu0 %1040
    %1043 = vset.pattern.permute.xlu0 1
    %1044 = vperm.xlu0 %1043, %v910
    %v1045 = vpop.permute.xlu0 %1044
    %1047 = vset.pattern.permute.xlu0 1
    %1048 = vperm.xlu0 %1047, %v911
    %v1049 = vpop.permute.xlu0 %1048
    %1051 = vset.pattern.permute.xlu0 1
    %1052 = vperm.xlu0 %1051, %v912
    %v1053 = vpop.permute.xlu0 %1052
    %1055 = vset.pattern.permute.xlu0 1
    %1056 = vperm.xlu0 %1055, %v913
    %v1057 = vpop.permute.xlu0 %1056
    %1059 = vset.pattern.permute.xlu0 1
    %1060 = vperm.xlu0 %1059, %v914
    %v1061 = vpop.permute.xlu0 %1060
    %1063 = vset.pattern.permute.xlu0 1
    %1064 = vperm.xlu0 %1063, %v915
    %v1065 = vpop.permute.xlu0 %1064
    %1067 = vset.pattern.permute.xlu0 1
    %1068 = vperm.xlu0 %1067, %v916
    %v1069 = vpop.permute.xlu0 %1068
    %1071 = vset.pattern.permute.xlu0 1
    %1072 = vperm.xlu0 %1071, %v917
    %v1073 = vpop.permute.xlu0 %1072
    %1075 = vset.pattern.permute.xlu0 1
    %1076 = vperm.xlu0 %1075, %v918
    %v1077 = vpop.permute.xlu0 %1076
    %v1079 = vmul.f32 %v1017, %v872
    %v1080 = vmul.f32 %v1021, %v874
    %v1081 = vmul.f32 %v1025, %v876
    %v1082 = vmul.f32 %v1029, %v878
    %v1083 = vmul.f32 %v1033, %v880
    %v1084 = vmul.f32 %v1037, %v882
    %v1085 = vmul.f32 %v1041, %v884
    %v1086 = vmul.f32 %v1045, %v886
    %v1087 = vmul.f32 %v1049, %v888
    %v1088 = vmul.f32 %v1053, %v890
    %v1089 = vmul.f32 %v1057, %v892
    %v1090 = vmul.f32 %v1061, %v894
    %v1091 = vmul.f32 %v1065, %v896
    %v1092 = vmul.f32 %v1069, %v898
    %v1093 = vmul.f32 %v1073, %v900
    %v1094 = vmul.f32 %v1077, %v902
    %v1095 = vadd.f32 %v999, %v1079
    %v1096 = vadd.f32 %v1000, %v1080
    %v1097 = vadd.f32 %v1001, %v1081
    %v1098 = vadd.f32 %v1002, %v1082
    %v1099 = vadd.f32 %v1003, %v1083
    %v1100 = vadd.f32 %v1004, %v1084
    %v1101 = vadd.f32 %v1005, %v1085
    %v1102 = vadd.f32 %v1006, %v1086
    %v1103 = vadd.f32 %v1007, %v1087
    %v1104 = vadd.f32 %v1008, %v1088
    %v1105 = vadd.f32 %v1009, %v1089
    %v1106 = vadd.f32 %v1010, %v1090
    %v1107 = vadd.f32 %v1011, %v1091
    %v1108 = vadd.f32 %v1012, %v1092
    %v1109 = vadd.f32 %v1013, %v1093
    %v1110 = vadd.f32 %v1014, %v1094
    %v1111 = vmax.f32 %v1095, 0.0
    %v1112 = vmax.f32 %v1096, 0.0
    %v1113 = vmax.f32 %v1097, 0.0
    %v1114 = vmax.f32 %v1098, 0.0
    %v1115 = vmax.f32 %v1099, 0.0
    %v1116 = vmax.f32 %v1100, 0.0
    %v1117 = vmax.f32 %v1101, 0.0
    %v1118 = vmax.f32 %v1102, 0.0
    %v1119 = vmax.f32 %v1103, 0.0
    %v1120 = vmax.f32 %v1104, 0.0
    %v1121 = vmax.f32 %v1105, 0.0
    %v1122 = vmax.f32 %v1106, 0.0
    %v1123 = vmax.f32 %v1107, 0.0
    %v1124 = vmax.f32 %v1108, 0.0
    %v1125 = vmax.f32 %v1109, 0.0
    %v1126 = vmax.f32 %v1110, 0.0
    %v1127 = vmul.f32 %v1111, %v1111
    %v1128 = vmul.f32 %v1112, %v1112
    %v1129 = vmul.f32 %v1113, %v1113
    %v1130 = vmul.f32 %v1114, %v1114
    %v1131 = vmul.f32 %v1115, %v1115
    %v1132 = vmul.f32 %v1116, %v1116
    %v1133 = vmul.f32 %v1117, %v1117
    %v1134 = vmul.f32 %v1118, %v1118
    %v1135 = vmul.f32 %v1119, %v1119
    %v1136 = vmul.f32 %v1120, %v1120
    %v1137 = vmul.f32 %v1121, %v1121
    %v1138 = vmul.f32 %v1122, %v1122
    %v1139 = vmul.f32 %v1123, %v1123
    %v1140 = vmul.f32 %v1124, %v1124
    %v1141 = vmul.f32 %v1125, %v1125
    %v1142 = vmul.f32 %v1126, %v1126
    %1143 = vadd.xlane.f32.xlu0 %v1127
    %v1144 = vpop.xlane.xlu0 %1143
    %1145 = vadd.xlane.f32.xlu0 %v1128
    %v1146 = vpop.xlane.xlu0 %1145
    %1147 = vadd.xlane.f32.xlu0 %v1129
    %v1148 = vpop.xlane.xlu0 %1147
    %1149 = vadd.xlane.f32.xlu0 %v1130
    %v1150 = vpop.xlane.xlu0 %1149
    %1151 = vadd.xlane.f32.xlu0 %v1131
    %v1152 = vpop.xlane.xlu0 %1151
    %1153 = vadd.xlane.f32.xlu0 %v1132
    %v1154 = vpop.xlane.xlu0 %1153
    %1155 = vadd.xlane.f32.xlu0 %v1133
    %v1156 = vpop.xlane.xlu0 %1155
    %1157 = vadd.xlane.f32.xlu0 %v1134
    %v1158 = vpop.xlane.xlu0 %1157
    %1159 = vadd.xlane.f32.xlu0 %v1135
    %v1160 = vpop.xlane.xlu0 %1159
    %1161 = vadd.xlane.f32.xlu0 %v1136
    %v1162 = vpop.xlane.xlu0 %1161
    %1163 = vadd.xlane.f32.xlu0 %v1137
    %v1164 = vpop.xlane.xlu0 %1163
    %1165 = vadd.xlane.f32.xlu0 %v1138
    %v1166 = vpop.xlane.xlu0 %1165
    %1167 = vadd.xlane.f32.xlu0 %v1139
    %v1168 = vpop.xlane.xlu0 %1167
    %1169 = vadd.xlane.f32.xlu0 %v1140
    %v1170 = vpop.xlane.xlu0 %1169
    %1171 = vadd.xlane.f32.xlu0 %v1141
    %v1172 = vpop.xlane.xlu0 %1171
    %1173 = vadd.xlane.f32.xlu0 %v1142
    %v1174 = vpop.xlane.xlu0 %1173
    %v1175 = vmax.f32 %v1144, 1e-24
    %v1176 = vmax.f32 %v1146, 1e-24
    %v1177 = vmax.f32 %v1148, 1e-24
    %v1178 = vmax.f32 %v1150, 1e-24
    %v1179 = vmax.f32 %v1152, 1e-24
    %v1180 = vmax.f32 %v1154, 1e-24
    %v1181 = vmax.f32 %v1156, 1e-24
    %v1182 = vmax.f32 %v1158, 1e-24
    %v1183 = vmax.f32 %v1160, 1e-24
    %v1184 = vmax.f32 %v1162, 1e-24
    %v1185 = vmax.f32 %v1164, 1e-24
    %v1186 = vmax.f32 %v1166, 1e-24
    %v1187 = vmax.f32 %v1168, 1e-24
    %v1188 = vmax.f32 %v1170, 1e-24
    %v1189 = vmax.f32 %v1172, 1e-24
    %v1190 = vmax.f32 %v1174, 1e-24
    %v1191 = vrsqrt.pop %v1175
    %v1192 = vmul.f32 %v1191, %v1175
    %v1193 = vmul.f32 %v1192, %v1191
    %v1194 = vmul.f32 0.5, %v1193
    %v1195 = vsub.f32 1.5, %v1194
    %v1196 = vmul.f32 %v1191, %v1195
    %vm1197 = vweird.f32 %v1175
    %vm1198 = vweird.f32 %v1191
    %vm1199 = vmor %vm1197, %vm1198
    %v1200 = vsel %vm1199, %v1191, %v1196
    %v1201 = vrsqrt.pop %v1176
    %v1202 = vmul.f32 %v1201, %v1176
    %v1203 = vmul.f32 %v1202, %v1201
    %v1204 = vmul.f32 0.5, %v1203
    %v1205 = vsub.f32 1.5, %v1204
    %v1206 = vmul.f32 %v1201, %v1205
    %vm1207 = vweird.f32 %v1176
    %vm1208 = vweird.f32 %v1201
    %vm1209 = vmor %vm1207, %vm1208
    %v1210 = vsel %vm1209, %v1201, %v1206
    %v1211 = vrsqrt.pop %v1177
    %v1212 = vmul.f32 %v1211, %v1177
    %v1213 = vmul.f32 %v1212, %v1211
    %v1214 = vmul.f32 0.5, %v1213
    %v1215 = vsub.f32 1.5, %v1214
    %v1216 = vmul.f32 %v1211, %v1215
    %vm1217 = vweird.f32 %v1177
    %vm1218 = vweird.f32 %v1211
    %vm1219 = vmor %vm1217, %vm1218
    %v1220 = vsel %vm1219, %v1211, %v1216
    %v1221 = vrsqrt.pop %v1178
    %v1222 = vmul.f32 %v1221, %v1178
    %v1223 = vmul.f32 %v1222, %v1221
    %v1224 = vmul.f32 0.5, %v1223
    %v1225 = vsub.f32 1.5, %v1224
    %v1226 = vmul.f32 %v1221, %v1225
    %vm1227 = vweird.f32 %v1178
    %vm1228 = vweird.f32 %v1221
    %vm1229 = vmor %vm1227, %vm1228
    %v1230 = vsel %vm1229, %v1221, %v1226
    %v1231 = vrsqrt.pop %v1179
    %v1232 = vmul.f32 %v1231, %v1179
    %v1233 = vmul.f32 %v1232, %v1231
    %v1234 = vmul.f32 0.5, %v1233
    %v1235 = vsub.f32 1.5, %v1234
    %v1236 = vmul.f32 %v1231, %v1235
    %vm1237 = vweird.f32 %v1179
    %vm1238 = vweird.f32 %v1231
    %vm1239 = vmor %vm1237, %vm1238
    %v1240 = vsel %vm1239, %v1231, %v1236
    %v1241 = vrsqrt.pop %v1180
    %v1242 = vmul.f32 %v1241, %v1180
    %v1243 = vmul.f32 %v1242, %v1241
    %v1244 = vmul.f32 0.5, %v1243
    %v1245 = vsub.f32 1.5, %v1244
    %v1246 = vmul.f32 %v1241, %v1245
    %vm1247 = vweird.f32 %v1180
    %vm1248 = vweird.f32 %v1241
    %vm1249 = vmor %vm1247, %vm1248
    %v1250 = vsel %vm1249, %v1241, %v1246
    %v1251 = vrsqrt.pop %v1181
    %v1252 = vmul.f32 %v1251, %v1181
    %v1253 = vmul.f32 %v1252, %v1251
    %v1254 = vmul.f32 0.5, %v1253
    %v1255 = vsub.f32 1.5, %v1254
    %v1256 = vmul.f32 %v1251, %v1255
    %vm1257 = vweird.f32 %v1181
    %vm1258 = vweird.f32 %v1251
    %vm1259 = vmor %vm1257, %vm1258
    %v1260 = vsel %vm1259, %v1251, %v1256
    %v1261 = vrsqrt.pop %v1182
    %v1262 = vmul.f32 %v1261, %v1182
    %v1263 = vmul.f32 %v1262, %v1261
    %v1264 = vmul.f32 0.5, %v1263
    %v1265 = vsub.f32 1.5, %v1264
    %v1266 = vmul.f32 %v1261, %v1265
    %vm1267 = vweird.f32 %v1182
    %vm1268 = vweird.f32 %v1261
    %vm1269 = vmor %vm1267, %vm1268
    %v1270 = vsel %vm1269, %v1261, %v1266
    %v1271 = vrsqrt.pop %v1183
    %v1272 = vmul.f32 %v1271, %v1183
    %v1273 = vmul.f32 %v1272, %v1271
    %v1274 = vmul.f32 0.5, %v1273
    %v1275 = vsub.f32 1.5, %v1274
    %v1276 = vmul.f32 %v1271, %v1275
    %vm1277 = vweird.f32 %v1183
    %vm1278 = vweird.f32 %v1271
    %vm1279 = vmor %vm1277, %vm1278
    %v1280 = vsel %vm1279, %v1271, %v1276
    %v1281 = vrsqrt.pop %v1184
    %v1282 = vmul.f32 %v1281, %v1184
    %v1283 = vmul.f32 %v1282, %v1281
    %v1284 = vmul.f32 0.5, %v1283
    %v1285 = vsub.f32 1.5, %v1284
    %v1286 = vmul.f32 %v1281, %v1285
    %vm1287 = vweird.f32 %v1184
    %vm1288 = vweird.f32 %v1281
    %vm1289 = vmor %vm1287, %vm1288
    %v1290 = vsel %vm1289, %v1281, %v1286
    %v1291 = vrsqrt.pop %v1185
    %v1292 = vmul.f32 %v1291, %v1185
    %v1293 = vmul.f32 %v1292, %v1291
    %v1294 = vmul.f32 0.5, %v1293
    %v1295 = vsub.f32 1.5, %v1294
    %v1296 = vmul.f32 %v1291, %v1295
    %vm1297 = vweird.f32 %v1185
    %vm1298 = vweird.f32 %v1291
    %vm1299 = vmor %vm1297, %vm1298
    %v1300 = vsel %vm1299, %v1291, %v1296
    %v1301 = vrsqrt.pop %v1186
    %v1302 = vmul.f32 %v1301, %v1186
    %v1303 = vmul.f32 %v1302, %v1301
    %v1304 = vmul.f32 0.5, %v1303
    %v1305 = vsub.f32 1.5, %v1304
    %v1306 = vmul.f32 %v1301, %v1305
    %vm1307 = vweird.f32 %v1186
    %vm1308 = vweird.f32 %v1301
    %vm1309 = vmor %vm1307, %vm1308
    %v1310 = vsel %vm1309, %v1301, %v1306
    %v1311 = vrsqrt.pop %v1187
    %v1312 = vmul.f32 %v1311, %v1187
    %v1313 = vmul.f32 %v1312, %v1311
    %v1314 = vmul.f32 0.5, %v1313
    %v1315 = vsub.f32 1.5, %v1314
    %v1316 = vmul.f32 %v1311, %v1315
    %vm1317 = vweird.f32 %v1187
    %vm1318 = vweird.f32 %v1311
    %vm1319 = vmor %vm1317, %vm1318
    %v1320 = vsel %vm1319, %v1311, %v1316
    %v1321 = vrsqrt.pop %v1188
    %v1322 = vmul.f32 %v1321, %v1188
    %v1323 = vmul.f32 %v1322, %v1321
    %v1324 = vmul.f32 0.5, %v1323
    %v1325 = vsub.f32 1.5, %v1324
    %v1326 = vmul.f32 %v1321, %v1325
    %vm1327 = vweird.f32 %v1188
    %vm1328 = vweird.f32 %v1321
    %vm1329 = vmor %vm1327, %vm1328
    %v1330 = vsel %vm1329, %v1321, %v1326
    %v1331 = vrsqrt.pop %v1189
    %v1332 = vmul.f32 %v1331, %v1189
    %v1333 = vmul.f32 %v1332, %v1331
    %v1334 = vmul.f32 0.5, %v1333
    %v1335 = vsub.f32 1.5, %v1334
    %v1336 = vmul.f32 %v1331, %v1335
    %vm1337 = vweird.f32 %v1189
    %vm1338 = vweird.f32 %v1331
    %vm1339 = vmor %vm1337, %vm1338
    %v1340 = vsel %vm1339, %v1331, %v1336
    %v1341 = vrsqrt.pop %v1190
    %v1342 = vmul.f32 %v1341, %v1190
    %v1343 = vmul.f32 %v1342, %v1341
    %v1344 = vmul.f32 0.5, %v1343
    %v1345 = vsub.f32 1.5, %v1344
    %v1346 = vmul.f32 %v1341, %v1345
    %vm1347 = vweird.f32 %v1190
    %vm1348 = vweird.f32 %v1341
    %vm1349 = vmor %vm1347, %vm1348
    %v1350 = vsel %vm1349, %v1341, %v1346
    %v1351 = vmul.f32 %v1111, %v1200
    %v1352 = vmul.f32 %v1112, %v1210
    %v1353 = vmul.f32 %v1113, %v1220
    %v1354 = vmul.f32 %v1114, %v1230
    %v1355 = vmul.f32 %v1115, %v1240
    %v1356 = vmul.f32 %v1116, %v1250
    %v1357 = vmul.f32 %v1117, %v1260
    %v1358 = vmul.f32 %v1118, %v1270
    %v1359 = vmul.f32 %v1119, %v1280
    %v1360 = vmul.f32 %v1120, %v1290
    %v1361 = vmul.f32 %v1121, %v1300
    %v1362 = vmul.f32 %v1122, %v1310
    %v1363 = vmul.f32 %v1123, %v1320
    %v1364 = vmul.f32 %v1124, %v1330
    %v1365 = vmul.f32 %v1125, %v1340
    %v1366 = vmul.f32 %v1126, %v1350
    %v1367 = vpack.c.bf16 %v1351, %v1351
    %v1368 = vpack.c.bf16 %v1352, %v1352
    %v1369 = vpack.c.bf16 %v1353, %v1353
    %v1370 = vpack.c.bf16 %v1354, %v1354
    %v1371 = vpack.c.bf16 %v1355, %v1355
    %v1372 = vpack.c.bf16 %v1356, %v1356
    %v1373 = vpack.c.bf16 %v1357, %v1357
    %v1374 = vpack.c.bf16 %v1358, %v1358
    %v1375 = vpack.c.bf16 %v1359, %v1359
    %v1376 = vpack.c.bf16 %v1360, %v1360
    %v1377 = vpack.c.bf16 %v1361, %v1361
    %v1378 = vpack.c.bf16 %v1362, %v1362
    %v1379 = vpack.c.bf16 %v1363, %v1363
    %v1380 = vpack.c.bf16 %v1364, %v1364
    %v1381 = vpack.c.bf16 %v1365, %v1365
    %v1382 = vpack.c.bf16 %v1366, %v1366
    %1383 = vst [vmem:[%s8] sm:$0xf] %v1367
    %1384 = vst [vmem:[%s8 + $0x4] sm:$0xf] %v1368
    %1385 = vst [vmem:[%s8 + $0x8] sm:$0xf] %v1369
    %1386 = vst [vmem:[%s8 + $0xc] sm:$0xf] %v1370
    %1387 = vst [vmem:[%s8 + $0x10] sm:$0xf] %v1371
    %1388 = vst [vmem:[%s8 + $0x14] sm:$0xf] %v1372
    %1389 = vst [vmem:[%s8 + $0x18] sm:$0xf] %v1373
    %1390 = vst [vmem:[%s8 + $0x1c] sm:$0xf] %v1374
    %1391 = vst [vmem:[%s8 + $0x20] sm:$0xf] %v1375
    %1392 = vst [vmem:[%s8 + $0x24] sm:$0xf] %v1376
    %1393 = vst [vmem:[%s8 + $0x28] sm:$0xf] %v1377
    %1394 = vst [vmem:[%s8 + $0x2c] sm:$0xf] %v1378
    %1395 = vst [vmem:[%s8 + $0x30] sm:$0xf] %v1379
    %1396 = vst [vmem:[%s8 + $0x34] sm:$0xf] %v1380
    %1397 = vst [vmem:[%s8 + $0x38] sm:$0xf] %v1381
    %1398 = vst [vmem:[%s8 + $0x3c] sm:$0xf] %v1382
  $region41: #{gnn_stack_forward.6} parent=0 // pred_fallthru
    _
  // Predicated region
  $region42: #{gnn_stack_forward.6} parent=0 // pred_check
    _
  $region43: #{gnn_stack_forward.6} parent=0 // pred_check_branch
    %1400 = sbr.rel (0) target = $region45
  $region44: #{gnn_stack_forward.6} parent=0 // pred_region
    _
  $region45: #{gnn_stack_forward.6} parent=0 // pred_fallthru
    _
  // Predicated region
  $region46: #{gnn_stack_forward.6} parent=0 // pred_check
    _
  $region47: #{gnn_stack_forward.6} parent=0 // pred_check_branch
    %1402 = sbr.rel (0) target = $region49
  $region48: #{gnn_stack_forward.6} parent=0 // pred_region
    _
  $region49: #{gnn_stack_forward.6} parent=0 // pred_fallthru
    _

</llo_original>
